<compile_context>
chip_gen: v5e
topology: v5e:2x2
jax: 0.10.0
libtpu: 0.0.40
codegen_flags: <defaults>
</compile_context>

<pallas_src>
import math

import numpy as np

import jax
import jax.numpy as jnp
from jax.experimental import pallas as pl
from jax.experimental.pallas import tpu as pltpu

# ---------------- model hyper-parameters (small, consistent with __init__) --
NUM_NODES = 25       # V
NUM_PERSON = 2       # M
IN_CHANNELS = 3      # C
T_FRAMES = 8         # T (small synthetic temporal length)
HIDDEN_DIM = 64
N_WAY = 5
K_SHOT = 1
K_QUERY = 1
TASK_NUM = 2
UPDATE_STEP = 5
FEAT_DIM = IN_CHANNELS * T_FRAMES * NUM_NODES * NUM_PERSON      # 1200 (flattened sample)
FEAT_PAD = ((FEAT_DIM + 127) // 128) * 128                      # 1280 (lane-aligned)
assert FEAT_PAD > FEAT_DIM, "need one spare lane-pad column for the folded bias"

_VMEM = pl.BlockSpec(memory_space=pltpu.MemorySpace.VMEM)


# --------------------------------------------------------------------------
# Single fused kernel (one ungridded pallas_call per forward).
#
#   x_ref  : [N, FEAT_PAD] bf16   flattened samples; column FEAT_DIM is 1.0 (bias
#                                 feature), remaining pad columns are 0.
#   y_ref  : [N, 1]        int32  class labels (support rows first, then query)
#   w1_ref : [FEAT_PAD, H] bf16   W1 with b1 at row FEAT_DIM (rows > FEAT_DIM zero)
#   w2_ref : [H+8, n_way]  f32    W2 in rows 0..H-1, b2 at row H
#   out    : [1, 128]      f32    lane 0: sum_i query loss (CE + 0.1*LDA)
#                                 lane 1: sum_i query correct count
#                                 lane 2: sum_i support loss (informational)
# All (task, support/query) segment structure is static and rebuilt from iota.
# --------------------------------------------------------------------------
def _make_meta_kernel(task_num, setsz, querysz, n_way, hidden):
    n_spt = task_num * setsz
    n_qry = task_num * querysz
    n = n_spt + n_qry
    n_seg = 2 * task_num                  # (task, support/query) segments
    n_slot = n_seg * n_way                # (segment, class) slots
    starts = [s * setsz for s in range(task_num)] + \
             [n_spt + t * querysz for t in range(task_num)]
    boundaries = starts[1:]               # static segment boundaries (no int div needed)
    inv_spt = 1.0 / float(setsz)
    inv_qry = 1.0 / float(querysz)

    def kernel(x_ref, y_ref, w1_ref, w2p_ref, out_ref):
        f32 = jnp.float32
        x = x_ref[...]                                              # [N, FEAT_PAD] bf16
        y = y_ref[...]                                              # [N, 1] int32

        # ---- feature head: b1 folded into W1 via the ones bias column of x ----
        h = jnp.dot(x, w1_ref[...], preferred_element_type=f32)     # x@W1 + b1
        h = jnp.maximum(h, 0.0)                                     # [N, H] f32
        w2 = w2p_ref[:hidden, :]
        b2 = w2p_ref[hidden:hidden + 1, :]
        logits = jnp.dot(h, w2, preferred_element_type=f32) + b2    # [N, n_way]

        # ---- static (task,set) structure rebuilt in-kernel (no mask operands) ----
        r_col = jax.lax.broadcasted_iota(jnp.int32, (n, 1), 0)
        seg_id = jnp.zeros((n, 1), jnp.int32)
        for b in boundaries:                                        # static unroll
            seg_id = seg_id + (r_col >= b).astype(jnp.int32)
        slot_id = seg_id * n_way + y                                # per-row slot index

        cls_lane = jax.lax.broadcasted_iota(jnp.int32, (n, n_way), 1)
        oh_cls = (cls_lane == y).astype(f32)                        # [N, n_way]
        slot_lane = jax.lax.broadcasted_iota(jnp.int32, (n, n_slot), 1)
        oh_sc = (slot_lane == slot_id).astype(f32)                  # [N, S*n_way]
        seg_lane = jax.lax.broadcasted_iota(jnp.int32, (n, n_seg), 1)
        seg = (seg_lane == seg_id).astype(f32)                      # [N, S]

        si = jax.lax.broadcasted_iota(jnp.int32, (n_seg, n), 0)
        ri = jax.lax.broadcasted_iota(jnp.int32, (n_seg, n), 1)
        start = jnp.where(si < task_num, si * setsz,
                          n_spt + (si - task_num) * querysz)
        size = jnp.where(si < task_num, setsz, querysz)
        seg_t = ((ri >= start) & (ri < start + size)).astype(f32)   # [S, N] (pre-"transposed")

        s_col = jax.lax.broadcasted_iota(jnp.int32, (n_seg, 1), 0)
        qmask = (s_col >= task_num).astype(f32)                     # [S, 1]
        inv_rows = jnp.where(s_col < task_num, inv_spt, inv_qry).astype(f32)

        # ---- per-row cross-entropy + first-argmax correctness ----
        mx = jnp.max(logits, axis=-1, keepdims=True)
        lse = jnp.log(jnp.sum(jnp.exp(logits - mx), axis=-1, keepdims=True)) + mx
        nll = jnp.sum((lse - logits) * oh_cls, axis=-1, keepdims=True)     # [N,1]
        pred = jnp.min(jnp.where(logits >= mx, cls_lane, n_way),
                       axis=-1, keepdims=True)                             # first argmax
        eq = (pred == y).astype(f32)                                       # [N,1]

        # ---- LDA pieces: per-row squared distances (count-weighting implicit) ----
        dn0 = (((0,), (0,)), ((), ()))                 # contract over rows (A^T @ B)
        ones_n = jnp.ones((n, 1), f32)
        counts = jax.lax.dot_general(oh_sc, ones_n, dn0,
                                     preferred_element_type=f32)           # [S*nw,1]
        class_sums = jax.lax.dot_general(oh_sc, h, dn0,
                                         preferred_element_type=f32)       # [S*nw,H]
        class_means = class_sums * pl.reciprocal(jnp.maximum(counts, 1.0),
                                                 approx=True)
        cm_row = jnp.dot(oh_sc, class_means, preferred_element_type=f32)   # [N,H]
        xc = h - cm_row
        sw_row = jnp.sum(xc * xc, axis=-1, keepdims=True)                  # [N,1]

        seg_sums = jnp.dot(seg_t, h, preferred_element_type=f32)           # [S,H]
        seg_means = seg_sums * inv_rows
        sm_row = jnp.dot(seg, seg_means, preferred_element_type=f32)       # [N,H]
        dd = cm_row - sm_row
        sb_row = jnp.sum(dd * dd, axis=-1, keepdims=True)                  # [N,1]
        # seg-summing sb_row == sum_c Nc * ||mean_c - mean_seg||^2 (no sqrt needed)

        # ---- ONE fused segment reduction for all four per-row statistics ----
        lane4 = jax.lax.broadcasted_iota(jnp.int32, (n, 4), 1)
        vals = (jnp.where(lane4 == 0, nll, 0.0)
                + jnp.where(lane4 == 1, eq, 0.0)
                + jnp.where(lane4 == 2, sw_row, 0.0)
                + jnp.where(lane4 == 3, sb_row, 0.0))                       # [N,4]
        segv = jnp.dot(seg_t, vals, preferred_element_type=f32)            # [S,4]

        ce_seg = segv[:, 0:1] * inv_rows                 # per-segment mean cross-entropy
        corr_seg = segv[:, 1:2]                          # per-segment correct count
        lda_seg = segv[:, 2:3] * pl.reciprocal(segv[:, 3:4] + 1e-6, approx=True)
        loss_seg = ce_seg + 0.1 * lda_seg                                   # [S,1]

        qloss = jnp.sum(loss_seg * qmask, axis=0, keepdims=True)            # (1,1)
        qcorr = jnp.sum(corr_seg * qmask, axis=0, keepdims=True)
        sloss = jnp.sum(loss_seg * (1.0 - qmask), axis=0, keepdims=True)

        # ---- pack scalars into one lane-dense output slab ----
        lane = jax.lax.broadcasted_iota(jnp.int32, out_ref.shape, 1)
        out_ref[...] = (jnp.where(lane == 0, qloss, 0.0)
                        + jnp.where(lane == 1, qcorr, 0.0)
                        + jnp.where(lane == 2, sloss, 0.0))

    return kernel


# --------------------------------------------------------------------------
# Forward pass (mirrors Meta.forward's loop structure, fully batched)
# --------------------------------------------------------------------------
def meta_forward(x_spt, y_spt, x_qry, y_qry, params):
    w1p, w2p = params                      # pre-packed in init_params (no per-call cost)
    task_num, setsz = x_spt.shape[0], x_spt.shape[1]
    querysz = x_qry.shape[1]
    n_spt, n_qry = task_num * setsz, task_num * querysz
    n = n_spt + n_qry

    # Minimal wrapper prep: flatten rows, one cast, one concat with a trace-time
    # constant pad block whose first column is the bias "ones" feature.
    x_flat = jnp.concatenate(
        [x_spt.reshape(n_spt, -1), x_qry.reshape(n_qry, -1)], axis=0
    ).astype(jnp.bfloat16)                                    # [N, FEAT_DIM]
    pad_np = np.zeros((n, FEAT_PAD - FEAT_DIM), np.float32)
    pad_np[:, 0] = 1.0                                        # bias feature column
    x_all = jnp.concatenate([x_flat, jnp.asarray(pad_np, dtype=jnp.bfloat16)], axis=1)

    y_col = jnp.concatenate([y_spt.reshape(-1), y_qry.reshape(-1)], axis=0)
    y_col = y_col.astype(jnp.int32).reshape(n, 1)

    kernel = _make_meta_kernel(task_num, setsz, querysz, N_WAY, HIDDEN_DIM)
    metrics = pl.pallas_call(
        kernel,
        out_shape=jax.ShapeDtypeStruct((1, 128), jnp.float32),
        in_specs=[_VMEM] * 4,
        out_specs=_VMEM,
    )(x_all, y_col, w1p, w2p)

    qloss_sum = metrics[0, 0]     # sum over tasks of query (CE + 0.1*LDA)
    qcorr_sum = metrics[0, 1]     # sum over tasks of query correct count
    # metrics[0, 2] = summed support loss (would drive the fast-weight update)

    # TODO(synk): torch.autograd.grad fast-weight updates over undefined
    # `params`/`self.net`/`self.GCN` are not reproducible (training-time
    # autodiff); params are constant across k, so every update-step slot
    # receives the identical query loss / correct count.
    losses_q = jnp.full((UPDATE_STEP + 1,), qloss_sum, dtype=jnp.float32)
    corrects = jnp.full((UPDATE_STEP + 1,), qcorr_sum, dtype=jnp.float32)
    accs = corrects / float(querysz * task_num)
    return accs, losses_q


def init_params(key):
    k1, k2 = jax.random.split(key, 2)
    w1 = jax.random.normal(k1, (FEAT_DIM, HIDDEN_DIM), jnp.float32) / math.sqrt(FEAT_DIM)
    b1 = jnp.zeros((HIDDEN_DIM,), jnp.float32)
    w2 = jax.random.normal(k2, (HIDDEN_DIM, N_WAY), jnp.float32) / math.sqrt(HIDDEN_DIM)
    b2 = jnp.zeros((N_WAY,), jnp.float32)

    # Pack W1+b1 (bf16, b1 at row FEAT_DIM to pair with x's bias column; rows
    # beyond it stay zero so the lane padding contributes nothing).
    w1p = jnp.zeros((FEAT_PAD, HIDDEN_DIM), jnp.float32)
    w1p = w1p.at[:FEAT_DIM, :].set(w1).at[FEAT_DIM, :].set(b1).astype(jnp.bfloat16)
    # Pack W2+b2 (f32, b2 at row HIDDEN_DIM; extra rows zero for sublane tidiness).
    w2p = jnp.zeros((HIDDEN_DIM + 8, N_WAY), jnp.float32)
    w2p = w2p.at[:HIDDEN_DIM, :].set(w2).at[HIDDEN_DIM, :].set(b2)
    return (w1p, w2p)


if __name__ == "__main__":
    key = jax.random.PRNGKey(0)
    kp, ks, kq, kys, kyq = jax.random.split(key, 5)

    params = init_params(kp)

    setsz = N_WAY * K_SHOT     # 5
    querysz = N_WAY * K_QUERY  # 5
    x_spt = jax.random.normal(
        ks, (TASK_NUM, setsz, IN_CHANNELS, T_FRAMES, NUM_NODES, NUM_PERSON), jnp.float32)
    x_qry = jax.random.normal(
        kq, (TASK_NUM, querysz, IN_CHANNELS, T_FRAMES, NUM_NODES, NUM_PERSON), jnp.float32)
    y_spt = jax.random.randint(kys, (TASK_NUM, setsz), 0, N_WAY, dtype=jnp.int32)
    y_qry = jax.random.randint(kyq, (TASK_NUM, querysz), 0, N_WAY, dtype=jnp.int32)

    accs, losses_q = jax.jit(meta_forward)(x_spt, y_spt, x_qry, y_qry, params)
    jax.block_until_ready((accs, losses_q))

    assert accs.shape == (UPDATE_STEP + 1,)
    assert losses_q.shape == (UPDATE_STEP + 1,)
    assert bool(jnp.all(jnp.isfinite(accs))) and bool(jnp.all(jnp.isfinite(losses_q)))
    print("KERNEL_OK")
</pallas_src>

<mosaic_0001>
module attributes {stable_mosaic.version = 11 : i64} {
  func.func @kernel(%arg0: memref<20x1280xbf16, #tpu.memory_space<vmem>>, %arg1: memref<20x1xi32, #tpu.memory_space<vmem>>, %arg2: memref<1280x64xbf16, #tpu.memory_space<vmem>>, %arg3: memref<72x5xf32, #tpu.memory_space<vmem>>, %arg4: memref<1x128xf32, #tpu.memory_space<vmem>>) attributes {dimension_semantics = [], scalar_prefetch = 0 : i64, scratch_operands = 0 : i64, tpu.core_type = #tpu.core_type<tc>} {
    %c0 = arith.constant 0 : index
    %c0_0 = arith.constant 0 : index
    %0 = vector.load %arg0[%c0, %c0_0] : memref<20x1280xbf16, #tpu.memory_space<vmem>>, vector<20x1280xbf16>
    %c0_1 = arith.constant 0 : index
    %c0_2 = arith.constant 0 : index
    %1 = vector.load %arg1[%c0_1, %c0_2] : memref<20x1xi32, #tpu.memory_space<vmem>>, vector<20x1xi32>
    %c0_3 = arith.constant 0 : index
    %c0_4 = arith.constant 0 : index
    %2 = vector.load %arg2[%c0_3, %c0_4] : memref<1280x64xbf16, #tpu.memory_space<vmem>>, vector<1280x64xbf16>
    %cst = arith.constant dense<0.000000e+00> : vector<20x64xf32>
    %3 = tpu.matmul %0, %2, %cst {dimension_numbers = #tpu.dot_dimension_numbers<[1], [0], [0], [1], [0, 0, 1, 1], [], []>} : vector<20x1280xbf16>, vector<1280x64xbf16>, vector<20x64xf32> -> vector<20x64xf32>
    %cst_5 = arith.constant 0.000000e+00 : f32
    %4 = vector.broadcast %cst_5 : f32 to vector<20x64xf32>
    %5 = arith.maximumf %3, %4 : vector<20x64xf32>
    %c0_6 = arith.constant 0 : index
    %c0_7 = arith.constant 0 : index
    %6 = vector.load %arg3[%c0_6, %c0_7] : memref<72x5xf32, #tpu.memory_space<vmem>>, vector<64x5xf32>
    %c64 = arith.constant 64 : index
    %c0_8 = arith.constant 0 : index
    %7 = vector.load %arg3[%c64, %c0_8] : memref<72x5xf32, #tpu.memory_space<vmem>>, vector<1x5xf32>
    %cst_9 = arith.constant dense<0.000000e+00> : vector<20x5xf32>
    %8 = tpu.matmul %5, %6, %cst_9 {dimension_numbers = #tpu.dot_dimension_numbers<[1], [0], [0], [1], [0, 0, 1, 1], [], []>} : vector<20x64xf32>, vector<64x5xf32>, vector<20x5xf32> -> vector<20x5xf32>
    %9 = vector.broadcast %7 : vector<1x5xf32> to vector<20x5xf32>
    %10 = arith.addf %8, %9 : vector<20x5xf32>
    %11 = tpu.iota {dimensions = array<i32: 0>} : vector<20x1xi32>
    %c0_i32 = arith.constant 0 : i32
    %12 = vector.broadcast %c0_i32 : i32 to vector<20x1xi32>
    %c5_i32 = arith.constant 5 : i32
    %13 = vector.broadcast %c5_i32 : i32 to vector<20x1xi32>
    %14 = arith.cmpi sge, %11, %13 : vector<20x1xi32>
    %15 = arith.extui %14 : vector<20x1xi1> to vector<20x1xi32>
    %16 = arith.addi %12, %15 : vector<20x1xi32>
    %c10_i32 = arith.constant 10 : i32
    %17 = vector.broadcast %c10_i32 : i32 to vector<20x1xi32>
    %18 = arith.cmpi sge, %11, %17 : vector<20x1xi32>
    %19 = arith.extui %18 : vector<20x1xi1> to vector<20x1xi32>
    %20 = arith.addi %16, %19 : vector<20x1xi32>
    %c15_i32 = arith.constant 15 : i32
    %21 = vector.broadcast %c15_i32 : i32 to vector<20x1xi32>
    %22 = arith.cmpi sge, %11, %21 : vector<20x1xi32>
    %23 = arith.extui %22 : vector<20x1xi1> to vector<20x1xi32>
    %24 = arith.addi %20, %23 : vector<20x1xi32>
    %c5_i32_10 = arith.constant 5 : i32
    %25 = vector.broadcast %c5_i32_10 : i32 to vector<20x1xi32>
    %26 = arith.muli %24, %25 : vector<20x1xi32>
    %27 = arith.addi %26, %1 : vector<20x1xi32>
    %28 = tpu.iota {dimensions = array<i32: 1>} : vector<20x5xi32>
    %29 = vector.broadcast %1 : vector<20x1xi32> to vector<20x5xi32>
    %30 = arith.cmpi eq, %28, %29 : vector<20x5xi32>
    %31 = arith.extui %30 : vector<20x5xi1> to vector<20x5xi32>
    %32 = arith.sitofp %31 : vector<20x5xi32> to vector<20x5xf32>
    %33 = tpu.iota {dimensions = array<i32: 1>} : vector<20x20xi32>
    %34 = vector.broadcast %27 : vector<20x1xi32> to vector<20x20xi32>
    %35 = arith.cmpi eq, %33, %34 : vector<20x20xi32>
    %36 = arith.extui %35 : vector<20x20xi1> to vector<20x20xi32>
    %37 = arith.sitofp %36 : vector<20x20xi32> to vector<20x20xf32>
    %38 = tpu.iota {dimensions = array<i32: 1>} : vector<20x4xi32>
    %39 = vector.broadcast %24 : vector<20x1xi32> to vector<20x4xi32>
    %40 = arith.cmpi eq, %38, %39 : vector<20x4xi32>
    %41 = arith.extui %40 : vector<20x4xi1> to vector<20x4xi32>
    %42 = arith.sitofp %41 : vector<20x4xi32> to vector<20x4xf32>
    %43 = tpu.iota {dimensions = array<i32: 0>} : vector<4x20xi32>
    %44 = tpu.iota {dimensions = array<i32: 1>} : vector<4x20xi32>
    %c2_i32 = arith.constant 2 : i32
    %45 = vector.broadcast %c2_i32 : i32 to vector<4x20xi32>
    %46 = arith.cmpi slt, %43, %45 : vector<4x20xi32>
    %c5_i32_11 = arith.constant 5 : i32
    %47 = vector.broadcast %c5_i32_11 : i32 to vector<4x20xi32>
    %48 = arith.muli %43, %47 : vector<4x20xi32>
    %c2_i32_12 = arith.constant 2 : i32
    %49 = vector.broadcast %c2_i32_12 : i32 to vector<4x20xi32>
    %50 = arith.subi %43, %49 : vector<4x20xi32>
    %c5_i32_13 = arith.constant 5 : i32
    %51 = vector.broadcast %c5_i32_13 : i32 to vector<4x20xi32>
    %52 = arith.muli %50, %51 : vector<4x20xi32>
    %c10_i32_14 = arith.constant 10 : i32
    %53 = vector.broadcast %c10_i32_14 : i32 to vector<4x20xi32>
    %54 = arith.addi %53, %52 : vector<4x20xi32>
    %55 = arith.select %46, %48, %54 : vector<4x20xi1>, vector<4x20xi32>
    %c2_i32_15 = arith.constant 2 : i32
    %56 = vector.broadcast %c2_i32_15 : i32 to vector<4x20xi32>
    %57 = arith.cmpi slt, %43, %56 : vector<4x20xi32>
    %c5_i32_16 = arith.constant 5 : i32
    %c5_i32_17 = arith.constant 5 : i32
    %58 = vector.broadcast %c5_i32_16 : i32 to vector<4x20xi32>
    %59 = vector.broadcast %c5_i32_17 : i32 to vector<4x20xi32>
    %60 = arith.select %57, %58, %59 : vector<4x20xi1>, vector<4x20xi32>
    %61 = arith.cmpi sge, %44, %55 : vector<4x20xi32>
    %62 = arith.addi %55, %60 : vector<4x20xi32>
    %63 = arith.cmpi slt, %44, %62 : vector<4x20xi32>
    %64 = arith.andi %61, %63 : vector<4x20xi1>
    %65 = arith.extui %64 : vector<4x20xi1> to vector<4x20xi32>
    %66 = arith.sitofp %65 : vector<4x20xi32> to vector<4x20xf32>
    %67 = tpu.iota {dimensions = array<i32: 0>} : vector<4x1xi32>
    %c2_i32_18 = arith.constant 2 : i32
    %68 = vector.broadcast %c2_i32_18 : i32 to vector<4x1xi32>
    %69 = arith.cmpi sge, %67, %68 : vector<4x1xi32>
    %70 = arith.extui %69 : vector<4x1xi1> to vector<4x1xi32>
    %71 = arith.sitofp %70 : vector<4x1xi32> to vector<4x1xf32>
    %c2_i32_19 = arith.constant 2 : i32
    %72 = vector.broadcast %c2_i32_19 : i32 to vector<4x1xi32>
    %73 = arith.cmpi slt, %67, %72 : vector<4x1xi32>
    %cst_20 = arith.constant 2.000000e-01 : f32
    %cst_21 = arith.constant 2.000000e-01 : f32
    %74 = vector.broadcast %cst_20 : f32 to vector<4x1xf32>
    %75 = vector.broadcast %cst_21 : f32 to vector<4x1xf32>
    %76 = arith.select %73, %74, %75 : vector<4x1xi1>, vector<4x1xf32>
    %cst_22 = arith.constant dense<0xFF800000> : vector<20xf32>
    %77 = vector.multi_reduction <maximumf>, %10, %cst_22 [1] : vector<20x5xf32> to vector<20xf32>
    %78 = vector.shape_cast %77 : vector<20xf32> to vector<20x1xf32>
    %79 = vector.broadcast %78 : vector<20x1xf32> to vector<20x5xf32>
    %80 = arith.subf %10, %79 : vector<20x5xf32>
    %81 = math.exp %80 : vector<20x5xf32>
    %cst_23 = arith.constant dense<0.000000e+00> : vector<20xf32>
    %82 = vector.multi_reduction <add>, %81, %cst_23 [1] : vector<20x5xf32> to vector<20xf32>
    %83 = vector.shape_cast %82 : vector<20xf32> to vector<20x1xf32>
    %84 = math.log %83 : vector<20x1xf32>
    %85 = arith.addf %84, %78 : vector<20x1xf32>
    %86 = vector.broadcast %85 : vector<20x1xf32> to vector<20x5xf32>
    %87 = arith.subf %86, %10 : vector<20x5xf32>
    %88 = arith.mulf %87, %32 : vector<20x5xf32>
    %cst_24 = arith.constant dense<0.000000e+00> : vector<20xf32>
    %89 = vector.multi_reduction <add>, %88, %cst_24 [1] : vector<20x5xf32> to vector<20xf32>
    %90 = vector.shape_cast %89 : vector<20xf32> to vector<20x1xf32>
    %91 = vector.broadcast %78 : vector<20x1xf32> to vector<20x5xf32>
    %92 = arith.cmpf oge, %10, %91 : vector<20x5xf32>
    %c5_i32_25 = arith.constant 5 : i32
    %93 = vector.broadcast %c5_i32_25 : i32 to vector<20x5xi32>
    %94 = arith.select %92, %28, %93 : vector<20x5xi1>, vector<20x5xi32>
    %cst_26 = arith.constant dense<2147483647> : vector<20xi32>
    %95 = vector.multi_reduction <minsi>, %94, %cst_26 [1] : vector<20x5xi32> to vector<20xi32>
    %96 = vector.shape_cast %95 : vector<20xi32> to vector<20x1xi32>
    %97 = arith.cmpi eq, %96, %1 : vector<20x1xi32>
    %98 = arith.extui %97 : vector<20x1xi1> to vector<20x1xi32>
    %99 = arith.sitofp %98 : vector<20x1xi32> to vector<20x1xf32>
    %cst_27 = arith.constant 1.000000e+00 : f32
    %100 = vector.broadcast %cst_27 : f32 to vector<20x1xf32>
    %cst_28 = arith.constant dense<0.000000e+00> : vector<20x1xf32>
    %101 = tpu.matmul %37, %100, %cst_28 {dimension_numbers = #tpu.dot_dimension_numbers<[0], [0], [1], [1], [0, 1, 1, 1], [], []>} : vector<20x20xf32>, vector<20x1xf32>, vector<20x1xf32> -> vector<20x1xf32>
    %cst_29 = arith.constant dense<0.000000e+00> : vector<20x64xf32>
    %102 = tpu.matmul %37, %5, %cst_29 {dimension_numbers = #tpu.dot_dimension_numbers<[0], [0], [1], [1], [0, 1, 1, 1], [], []>} : vector<20x20xf32>, vector<20x64xf32>, vector<20x64xf32> -> vector<20x64xf32>
    %cst_30 = arith.constant 1.000000e+00 : f32
    %103 = vector.broadcast %cst_30 : f32 to vector<20x1xf32>
    %104 = arith.maximumf %101, %103 : vector<20x1xf32>
    %105 = tpu.reciprocal %104 {approx = true} : vector<20x1xf32> -> vector<20x1xf32>
    %106 = vector.broadcast %105 : vector<20x1xf32> to vector<20x64xf32>
    %107 = arith.mulf %102, %106 : vector<20x64xf32>
    %cst_31 = arith.constant dense<0.000000e+00> : vector<20x64xf32>
    %108 = tpu.matmul %37, %107, %cst_31 {dimension_numbers = #tpu.dot_dimension_numbers<[1], [0], [0], [1], [0, 0, 1, 1], [], []>} : vector<20x20xf32>, vector<20x64xf32>, vector<20x64xf32> -> vector<20x64xf32>
    %109 = arith.subf %5, %108 : vector<20x64xf32>
    %110 = arith.mulf %109, %109 : vector<20x64xf32>
    %cst_32 = arith.constant dense<0.000000e+00> : vector<20xf32>
    %111 = vector.multi_reduction <add>, %110, %cst_32 [1] : vector<20x64xf32> to vector<20xf32>
    %112 = vector.shape_cast %111 : vector<20xf32> to vector<20x1xf32>
    %cst_33 = arith.constant dense<0.000000e+00> : vector<4x64xf32>
    %113 = tpu.matmul %66, %5, %cst_33 {dimension_numbers = #tpu.dot_dimension_numbers<[1], [0], [0], [1], [0, 0, 1, 1], [], []>} : vector<4x20xf32>, vector<20x64xf32>, vector<4x64xf32> -> vector<4x64xf32>
    %114 = vector.broadcast %76 : vector<4x1xf32> to vector<4x64xf32>
    %115 = arith.mulf %113, %114 : vector<4x64xf32>
    %cst_34 = arith.constant dense<0.000000e+00> : vector<20x64xf32>
    %116 = tpu.matmul %42, %115, %cst_34 {dimension_numbers = #tpu.dot_dimension_numbers<[1], [0], [0], [1], [0, 0, 1, 1], [], []>} : vector<20x4xf32>, vector<4x64xf32>, vector<20x64xf32> -> vector<20x64xf32>
    %117 = arith.subf %108, %116 : vector<20x64xf32>
    %118 = arith.mulf %117, %117 : vector<20x64xf32>
    %cst_35 = arith.constant dense<0.000000e+00> : vector<20xf32>
    %119 = vector.multi_reduction <add>, %118, %cst_35 [1] : vector<20x64xf32> to vector<20xf32>
    %120 = vector.shape_cast %119 : vector<20xf32> to vector<20x1xf32>
    %121 = tpu.iota {dimensions = array<i32: 1>} : vector<20x4xi32>
    %c0_i32_36 = arith.constant 0 : i32
    %122 = vector.broadcast %c0_i32_36 : i32 to vector<20x4xi32>
    %123 = arith.cmpi eq, %121, %122 : vector<20x4xi32>
    %cst_37 = arith.constant 0.000000e+00 : f32
    %124 = vector.shape_cast %90 : vector<20x1xf32> to vector<20x1xf32>
    %125 = vector.broadcast %124 : vector<20x1xf32> to vector<20x4xf32>
    %126 = vector.broadcast %cst_37 : f32 to vector<20x4xf32>
    %127 = arith.select %123, %125, %126 : vector<20x4xi1>, vector<20x4xf32>
    %c1_i32 = arith.constant 1 : i32
    %128 = vector.broadcast %c1_i32 : i32 to vector<20x4xi32>
    %129 = arith.cmpi eq, %121, %128 : vector<20x4xi32>
    %cst_38 = arith.constant 0.000000e+00 : f32
    %130 = vector.shape_cast %99 : vector<20x1xf32> to vector<20x1xf32>
    %131 = vector.broadcast %130 : vector<20x1xf32> to vector<20x4xf32>
    %132 = vector.broadcast %cst_38 : f32 to vector<20x4xf32>
    %133 = arith.select %129, %131, %132 : vector<20x4xi1>, vector<20x4xf32>
    %134 = arith.addf %127, %133 : vector<20x4xf32>
    %c2_i32_39 = arith.constant 2 : i32
    %135 = vector.broadcast %c2_i32_39 : i32 to vector<20x4xi32>
    %136 = arith.cmpi eq, %121, %135 : vector<20x4xi32>
    %cst_40 = arith.constant 0.000000e+00 : f32
    %137 = vector.shape_cast %112 : vector<20x1xf32> to vector<20x1xf32>
    %138 = vector.broadcast %137 : vector<20x1xf32> to vector<20x4xf32>
    %139 = vector.broadcast %cst_40 : f32 to vector<20x4xf32>
    %140 = arith.select %136, %138, %139 : vector<20x4xi1>, vector<20x4xf32>
    %141 = arith.addf %134, %140 : vector<20x4xf32>
    %c3_i32 = arith.constant 3 : i32
    %142 = vector.broadcast %c3_i32 : i32 to vector<20x4xi32>
    %143 = arith.cmpi eq, %121, %142 : vector<20x4xi32>
    %cst_41 = arith.constant 0.000000e+00 : f32
    %144 = vector.shape_cast %120 : vector<20x1xf32> to vector<20x1xf32>
    %145 = vector.broadcast %144 : vector<20x1xf32> to vector<20x4xf32>
    %146 = vector.broadcast %cst_41 : f32 to vector<20x4xf32>
    %147 = arith.select %143, %145, %146 : vector<20x4xi1>, vector<20x4xf32>
    %148 = arith.addf %141, %147 : vector<20x4xf32>
    %cst_42 = arith.constant dense<0.000000e+00> : vector<4x4xf32>
    %149 = tpu.matmul %66, %148, %cst_42 {dimension_numbers = #tpu.dot_dimension_numbers<[1], [0], [0], [1], [0, 0, 1, 1], [], []>} : vector<4x20xf32>, vector<20x4xf32>, vector<4x4xf32> -> vector<4x4xf32>
    %150 = vector.extract_strided_slice %149 {offsets = [0, 0], sizes = [4, 1], strides = [1, 1]} : vector<4x4xf32> to vector<4x1xf32>
    %151 = arith.mulf %150, %76 : vector<4x1xf32>
    %152 = vector.extract_strided_slice %149 {offsets = [0, 1], sizes = [4, 1], strides = [1, 1]} : vector<4x4xf32> to vector<4x1xf32>
    %153 = vector.extract_strided_slice %149 {offsets = [0, 2], sizes = [4, 1], strides = [1, 1]} : vector<4x4xf32> to vector<4x1xf32>
    %154 = vector.extract_strided_slice %149 {offsets = [0, 3], sizes = [4, 1], strides = [1, 1]} : vector<4x4xf32> to vector<4x1xf32>
    %cst_43 = arith.constant 9.99999997E-7 : f32
    %155 = vector.broadcast %cst_43 : f32 to vector<4x1xf32>
    %156 = arith.addf %154, %155 : vector<4x1xf32>
    %157 = tpu.reciprocal %156 {approx = true} : vector<4x1xf32> -> vector<4x1xf32>
    %158 = arith.mulf %153, %157 : vector<4x1xf32>
    %cst_44 = arith.constant 1.000000e-01 : f32
    %159 = vector.broadcast %cst_44 : f32 to vector<4x1xf32>
    %160 = arith.mulf %159, %158 : vector<4x1xf32>
    %161 = arith.addf %151, %160 : vector<4x1xf32>
    %162 = arith.mulf %161, %71 : vector<4x1xf32>
    %cst_45 = arith.constant dense<0.000000e+00> : vector<1xf32>
    %163 = vector.multi_reduction <add>, %162, %cst_45 [0] : vector<4x1xf32> to vector<1xf32>
    %164 = vector.shape_cast %163 : vector<1xf32> to vector<1x1xf32>
    %165 = arith.mulf %152, %71 : vector<4x1xf32>
    %cst_46 = arith.constant dense<0.000000e+00> : vector<1xf32>
    %166 = vector.multi_reduction <add>, %165, %cst_46 [0] : vector<4x1xf32> to vector<1xf32>
    %167 = vector.shape_cast %166 : vector<1xf32> to vector<1x1xf32>
    %cst_47 = arith.constant 1.000000e+00 : f32
    %168 = vector.broadcast %cst_47 : f32 to vector<4x1xf32>
    %169 = arith.subf %168, %71 : vector<4x1xf32>
    %170 = arith.mulf %161, %169 : vector<4x1xf32>
    %cst_48 = arith.constant dense<0.000000e+00> : vector<1xf32>
    %171 = vector.multi_reduction <add>, %170, %cst_48 [0] : vector<4x1xf32> to vector<1xf32>
    %172 = vector.shape_cast %171 : vector<1xf32> to vector<1x1xf32>
    %173 = tpu.iota {dimensions = array<i32: 1>} : vector<1x128xi32>
    %c0_i32_49 = arith.constant 0 : i32
    %174 = vector.broadcast %c0_i32_49 : i32 to vector<1x128xi32>
    %175 = arith.cmpi eq, %173, %174 : vector<1x128xi32>
    %cst_50 = arith.constant 0.000000e+00 : f32
    %176 = vector.shape_cast %164 : vector<1x1xf32> to vector<1x1xf32>
    %177 = vector.broadcast %176 : vector<1x1xf32> to vector<1x128xf32>
    %178 = vector.broadcast %cst_50 : f32 to vector<1x128xf32>
    %179 = arith.select %175, %177, %178 : vector<1x128xi1>, vector<1x128xf32>
    %c1_i32_51 = arith.constant 1 : i32
    %180 = vector.broadcast %c1_i32_51 : i32 to vector<1x128xi32>
    %181 = arith.cmpi eq, %173, %180 : vector<1x128xi32>
    %cst_52 = arith.constant 0.000000e+00 : f32
    %182 = vector.shape_cast %167 : vector<1x1xf32> to vector<1x1xf32>
    %183 = vector.broadcast %182 : vector<1x1xf32> to vector<1x128xf32>
    %184 = vector.broadcast %cst_52 : f32 to vector<1x128xf32>
    %185 = arith.select %181, %183, %184 : vector<1x128xi1>, vector<1x128xf32>
    %186 = arith.addf %179, %185 : vector<1x128xf32>
    %c2_i32_53 = arith.constant 2 : i32
    %187 = vector.broadcast %c2_i32_53 : i32 to vector<1x128xi32>
    %188 = arith.cmpi eq, %173, %187 : vector<1x128xi32>
    %cst_54 = arith.constant 0.000000e+00 : f32
    %189 = vector.shape_cast %172 : vector<1x1xf32> to vector<1x1xf32>
    %190 = vector.broadcast %189 : vector<1x1xf32> to vector<1x128xf32>
    %191 = vector.broadcast %cst_54 : f32 to vector<1x128xf32>
    %192 = arith.select %188, %190, %191 : vector<1x128xi1>, vector<1x128xf32>
    %193 = arith.addf %186, %192 : vector<1x128xf32>
    %c0_55 = arith.constant 0 : index
    %c0_56 = arith.constant 0 : index
    %194 = vector.load %arg4[%c0_55, %c0_56] : memref<1x128xf32, #tpu.memory_space<vmem>>, vector<1x128xf32>
    tpu.vector_store %arg4[%c0_55, %c0_56], %193 {strides = array<i32>} : memref<1x128xf32, #tpu.memory_space<vmem>>, vector<1x128xf32>,
    return
  }
}

</mosaic_0001>

<llo_original>
// kernel: meta_forward.1
$region0: #{meta_forward.1}
  #allocation0 [shape = 'u32[]', space=smem, size = 0x4, offset = 0x4, fixed_abs, tag = 'smem constant byte address 0x4 - core index']
  #allocation1 [shape = 'u32[72,128]{1,0:T(1,128)}', space=vmem, size = 0x9000, scoped, tag = 'internal scratch']
  %s0 = inlined_call_operand.vmem [shape: bf16[20,1280], index: 0, kind: input, shape index: {}]
  %s1 = inlined_call_operand.vmem [shape: s32[20,1], index: 1, kind: input, shape index: {}]
  %s2 = inlined_call_operand.vmem [shape: bf16[1280,64], index: 2, kind: input, shape index: {}]
  %s3 = inlined_call_operand.vmem [shape: f32[72,5], index: 3, kind: input, shape index: {}]
  %s4 = inlined_call_operand.vmem [shape: f32[1,128], index: 4, kind: output, shape index: {}]
  %s5 = sld [smem:[#allocation0]]
  $region26: #{meta_forward.1} parent=0
    _
  %s7 = ssub.s32 1, %s5
  %s8 = scalar_select 0, %s7, %s5
  // Predicated region
  $region2: #{meta_forward.1} parent=0 // pred_check
    _
  $region3: #{meta_forward.1} parent=0 // pred_check_branch
    %10 = sbr.rel (0) target = $region5
  $region4: #{meta_forward.1} parent=0 // pred_region
    _
  $region5: #{meta_forward.1} parent=0 // pred_fallthru
    _
  // Predicated region
  $region6: #{meta_forward.1} parent=0 // pred_check
    _
  $region7: #{meta_forward.1} parent=0 // pred_check_branch
    %12 = sbr.rel (0) target = $region9
  $region8: #{meta_forward.1} parent=0 // pred_region
    _
  $region9: #{meta_forward.1} parent=0 // pred_fallthru
    _
  // Predicated region
  $region10: #{meta_forward.1} parent=0 // pred_check
    _
  $region11: #{meta_forward.1} parent=0 // pred_check_branch
    %14 = sbr.rel (0) target = $region13
  $region12: #{meta_forward.1} parent=0 // pred_region
    _
  $region13: #{meta_forward.1} parent=0 // pred_fallthru
    _
  // Predicated region
  $region14: #{meta_forward.1} parent=0 // pred_check
    _
  $region15: #{meta_forward.1} parent=0 // pred_check_branch
    %16 = sbr.rel (0) target = $region17
  $region16: #{meta_forward.1} parent=0 // pred_region
    _
  $region17: #{meta_forward.1} parent=0 // pred_fallthru
    _
  %v17 = vld [vmem:[%s0] sm:$0xff]
  %v18 = vld [vmem:[%s0 + $0x8] sm:$0xff]
  %v19 = vld [vmem:[%s0 + $0x10] sm:$0xff]
  %v20 = vld [vmem:[%s0 + $0x18] sm:$0xff]
  %v21 = vld [vmem:[%s0 + $0x20] sm:$0xff]
  %v22 = vld [vmem:[%s0 + $0x28] sm:$0xff]
  %v23 = vld [vmem:[%s0 + $0x30] sm:$0xff]
  %v24 = vld [vmem:[%s0 + $0x38] sm:$0xff]
  %v25 = vld [vmem:[%s0 + $0x40] sm:$0xff]
  %v26 = vld [vmem:[%s0 + $0x48] sm:$0xff]
  %v27 = vld [vmem:[%s0 + $0x50] sm:$0x33]
  %v28 = vld [vmem:[%s0 + $0x58] sm:$0x33]
  %v29 = vld [vmem:[%s0 + $0x60] sm:$0x33]
  %v30 = vld [vmem:[%s0 + $0x68] sm:$0x33]
  %v31 = vld [vmem:[%s0 + $0x70] sm:$0x33]
  %v32 = vld [vmem:[%s1] sm:$0xff]
  %v33 = vld [vmem:[%s1 + $0x8] sm:$0xff]
  %v34 = vld [vmem:[%s1 + $0x10] sm:$0xf]
  %v35 = vld [vmem:[%s2] sm:$0xf]
  %v36 = vld [vmem:[%s2 + $0x4] sm:$0xf]
  %v37 = vld [vmem:[%s2 + $0x8] sm:$0xf]
  %v38 = vld [vmem:[%s2 + $0xc] sm:$0xf]
  %v39 = vld [vmem:[%s2 + $0x10] sm:$0xf]
  %v40 = vld [vmem:[%s2 + $0x14] sm:$0xf]
  %v41 = vld [vmem:[%s2 + $0x18] sm:$0xf]
  %v42 = vld [vmem:[%s2 + $0x1c] sm:$0xf]
  %v43 = vld [vmem:[%s2 + $0x20] sm:$0xf]
  %v44 = vld [vmem:[%s2 + $0x24] sm:$0xf]
  %v45 = vld [vmem:[%s2 + $0x28] sm:$0xf]
  %v46 = vld [vmem:[%s2 + $0x2c] sm:$0xf]
  %v47 = vld [vmem:[%s2 + $0x30] sm:$0xf]
  %v48 = vld [vmem:[%s2 + $0x34] sm:$0xf]
  %v49 = vld [vmem:[%s2 + $0x38] sm:$0xf]
  %v50 = vld [vmem:[%s2 + $0x3c] sm:$0xf]
  %v51 = vld [vmem:[%s2 + $0x40] sm:$0xf]
  %v52 = vld [vmem:[%s2 + $0x44] sm:$0xf]
  %v53 = vld [vmem:[%s2 + $0x48] sm:$0xf]
  %v54 = vld [vmem:[%s2 + $0x4c] sm:$0xf]
  %v55 = vld [vmem:[%s2 + $0x50] sm:$0xf]
  %v56 = vld [vmem:[%s2 + $0x54] sm:$0xf]
  %v57 = vld [vmem:[%s2 + $0x58] sm:$0xf]
  %v58 = vld [vmem:[%s2 + $0x5c] sm:$0xf]
  %v59 = vld [vmem:[%s2 + $0x60] sm:$0xf]
  %v60 = vld [vmem:[%s2 + $0x64] sm:$0xf]
  %v61 = vld [vmem:[%s2 + $0x68] sm:$0xf]
  %v62 = vld [vmem:[%s2 + $0x6c] sm:$0xf]
  %v63 = vld [vmem:[%s2 + $0x70] sm:$0xf]
  %v64 = vld [vmem:[%s2 + $0x74] sm:$0xf]
  %v65 = vld [vmem:[%s2 + $0x78] sm:$0xf]
  %v66 = vld [vmem:[%s2 + $0x7c] sm:$0xf]
  %v67 = vld [vmem:[%s2 + $0x80] sm:$0xf]
  %v68 = vld [vmem:[%s2 + $0x84] sm:$0xf]
  %v69 = vld [vmem:[%s2 + $0x88] sm:$0xf]
  %v70 = vld [vmem:[%s2 + $0x8c] sm:$0xf]
  %v71 = vld [vmem:[%s2 + $0x90] sm:$0xf]
  %v72 = vld [vmem:[%s2 + $0x94] sm:$0xf]
  %v73 = vld [vmem:[%s2 + $0x98] sm:$0xf]
  %v74 = vld [vmem:[%s2 + $0x9c] sm:$0xf]
  %v75 = vld [vmem:[%s2 + $0xa0] sm:$0xf]
  %v76 = vld [vmem:[%s2 + $0xa4] sm:$0xf]
  %v77 = vld [vmem:[%s2 + $0xa8] sm:$0xf]
  %v78 = vld [vmem:[%s2 + $0xac] sm:$0xf]
  %v79 = vld [vmem:[%s2 + $0xb0] sm:$0xf]
  %v80 = vld [vmem:[%s2 + $0xb4] sm:$0xf]
  %v81 = vld [vmem:[%s2 + $0xb8] sm:$0xf]
  %v82 = vld [vmem:[%s2 + $0xbc] sm:$0xf]
  %v83 = vld [vmem:[%s2 + $0xc0] sm:$0xf]
  %v84 = vld [vmem:[%s2 + $0xc4] sm:$0xf]
  %v85 = vld [vmem:[%s2 + $0xc8] sm:$0xf]
  %v86 = vld [vmem:[%s2 + $0xcc] sm:$0xf]
  %v87 = vld [vmem:[%s2 + $0xd0] sm:$0xf]
  %v88 = vld [vmem:[%s2 + $0xd4] sm:$0xf]
  %v89 = vld [vmem:[%s2 + $0xd8] sm:$0xf]
  %v90 = vld [vmem:[%s2 + $0xdc] sm:$0xf]
  %v91 = vld [vmem:[%s2 + $0xe0] sm:$0xf]
  %v92 = vld [vmem:[%s2 + $0xe4] sm:$0xf]
  %v93 = vld [vmem:[%s2 + $0xe8] sm:$0xf]
  %v94 = vld [vmem:[%s2 + $0xec] sm:$0xf]
  %v95 = vld [vmem:[%s2 + $0xf0] sm:$0xf]
  %v96 = vld [vmem:[%s2 + $0xf4] sm:$0xf]
  %v97 = vld [vmem:[%s2 + $0xf8] sm:$0xf]
  %v98 = vld [vmem:[%s2 + $0xfc] sm:$0xf]
  %v99 = vld [vmem:[%s2 + $0x100] sm:$0xf]
  %v100 = vld [vmem:[%s2 + $0x104] sm:$0xf]
  %v101 = vld [vmem:[%s2 + $0x108] sm:$0xf]
  %v102 = vld [vmem:[%s2 + $0x10c] sm:$0xf]
  %v103 = vld [vmem:[%s2 + $0x110] sm:$0xf]
  %v104 = vld [vmem:[%s2 + $0x114] sm:$0xf]
  %v105 = vld [vmem:[%s2 + $0x118] sm:$0xf]
  %v106 = vld [vmem:[%s2 + $0x11c] sm:$0xf]
  %v107 = vld [vmem:[%s2 + $0x120] sm:$0xf]
  %v108 = vld [vmem:[%s2 + $0x124] sm:$0xf]
  %v109 = vld [vmem:[%s2 + $0x128] sm:$0xf]
  %v110 = vld [vmem:[%s2 + $0x12c] sm:$0xf]
  %v111 = vld [vmem:[%s2 + $0x130] sm:$0xf]
  %v112 = vld [vmem:[%s2 + $0x134] sm:$0xf]
  %v113 = vld [vmem:[%s2 + $0x138] sm:$0xf]
  %v114 = vld [vmem:[%s2 + $0x13c] sm:$0xf]
  %v115 = vld [vmem:[%s2 + $0x140] sm:$0xf]
  %v116 = vld [vmem:[%s2 + $0x144] sm:$0xf]
  %v117 = vld [vmem:[%s2 + $0x148] sm:$0xf]
  %v118 = vld [vmem:[%s2 + $0x14c] sm:$0xf]
  %v119 = vld [vmem:[%s2 + $0x150] sm:$0xf]
  %v120 = vld [vmem:[%s2 + $0x154] sm:$0xf]
  %v121 = vld [vmem:[%s2 + $0x158] sm:$0xf]
  %v122 = vld [vmem:[%s2 + $0x15c] sm:$0xf]
  %v123 = vld [vmem:[%s2 + $0x160] sm:$0xf]
  %v124 = vld [vmem:[%s2 + $0x164] sm:$0xf]
  %v125 = vld [vmem:[%s2 + $0x168] sm:$0xf]
  %v126 = vld [vmem:[%s2 + $0x16c] sm:$0xf]
  %v127 = vld [vmem:[%s2 + $0x170] sm:$0xf]
  %v128 = vld [vmem:[%s2 + $0x174] sm:$0xf]
  %v129 = vld [vmem:[%s2 + $0x178] sm:$0xf]
  %v130 = vld [vmem:[%s2 + $0x17c] sm:$0xf]
  %v131 = vld [vmem:[%s2 + $0x180] sm:$0xf]
  %v132 = vld [vmem:[%s2 + $0x184] sm:$0xf]
  %v133 = vld [vmem:[%s2 + $0x188] sm:$0xf]
  %v134 = vld [vmem:[%s2 + $0x18c] sm:$0xf]
  %v135 = vld [vmem:[%s2 + $0x190] sm:$0xf]
  %v136 = vld [vmem:[%s2 + $0x194] sm:$0xf]
  %v137 = vld [vmem:[%s2 + $0x198] sm:$0xf]
  %v138 = vld [vmem:[%s2 + $0x19c] sm:$0xf]
  %v139 = vld [vmem:[%s2 + $0x1a0] sm:$0xf]
  %v140 = vld [vmem:[%s2 + $0x1a4] sm:$0xf]
  %v141 = vld [vmem:[%s2 + $0x1a8] sm:$0xf]
  %v142 = vld [vmem:[%s2 + $0x1ac] sm:$0xf]
  %v143 = vld [vmem:[%s2 + $0x1b0] sm:$0xf]
  %v144 = vld [vmem:[%s2 + $0x1b4] sm:$0xf]
  %v145 = vld [vmem:[%s2 + $0x1b8] sm:$0xf]
  %v146 = vld [vmem:[%s2 + $0x1bc] sm:$0xf]
  %v147 = vld [vmem:[%s2 + $0x1c0] sm:$0xf]
  %v148 = vld [vmem:[%s2 + $0x1c4] sm:$0xf]
  %v149 = vld [vmem:[%s2 + $0x1c8] sm:$0xf]
  %v150 = vld [vmem:[%s2 + $0x1cc] sm:$0xf]
  %v151 = vld [vmem:[%s2 + $0x1d0] sm:$0xf]
  %v152 = vld [vmem:[%s2 + $0x1d4] sm:$0xf]
  %v153 = vld [vmem:[%s2 + $0x1d8] sm:$0xf]
  %v154 = vld [vmem:[%s2 + $0x1dc] sm:$0xf]
  %v155 = vld [vmem:[%s2 + $0x1e0] sm:$0xf]
  %v156 = vld [vmem:[%s2 + $0x1e4] sm:$0xf]
  %v157 = vld [vmem:[%s2 + $0x1e8] sm:$0xf]
  %v158 = vld [vmem:[%s2 + $0x1ec] sm:$0xf]
  %v159 = vld [vmem:[%s2 + $0x1f0] sm:$0xf]
  %v160 = vld [vmem:[%s2 + $0x1f4] sm:$0xf]
  %v161 = vld [vmem:[%s2 + $0x1f8] sm:$0xf]
  %v162 = vld [vmem:[%s2 + $0x1fc] sm:$0xf]
  %v163 = vld [vmem:[%s2 + $0x200] sm:$0xf]
  %v164 = vld [vmem:[%s2 + $0x204] sm:$0xf]
  %v165 = vld [vmem:[%s2 + $0x208] sm:$0xf]
  %v166 = vld [vmem:[%s2 + $0x20c] sm:$0xf]
  %v167 = vld [vmem:[%s2 + $0x210] sm:$0xf]
  %v168 = vld [vmem:[%s2 + $0x214] sm:$0xf]
  %v169 = vld [vmem:[%s2 + $0x218] sm:$0xf]
  %v170 = vld [vmem:[%s2 + $0x21c] sm:$0xf]
  %v171 = vld [vmem:[%s2 + $0x220] sm:$0xf]
  %v172 = vld [vmem:[%s2 + $0x224] sm:$0xf]
  %v173 = vld [vmem:[%s2 + $0x228] sm:$0xf]
  %v174 = vld [vmem:[%s2 + $0x22c] sm:$0xf]
  %v175 = vld [vmem:[%s2 + $0x230] sm:$0xf]
  %v176 = vld [vmem:[%s2 + $0x234] sm:$0xf]
  %v177 = vld [vmem:[%s2 + $0x238] sm:$0xf]
  %v178 = vld [vmem:[%s2 + $0x23c] sm:$0xf]
  %v179 = vld [vmem:[%s2 + $0x240] sm:$0xf]
  %v180 = vld [vmem:[%s2 + $0x244] sm:$0xf]
  %v181 = vld [vmem:[%s2 + $0x248] sm:$0xf]
  %v182 = vld [vmem:[%s2 + $0x24c] sm:$0xf]
  %v183 = vld [vmem:[%s2 + $0x250] sm:$0xf]
  %v184 = vld [vmem:[%s2 + $0x254] sm:$0xf]
  %v185 = vld [vmem:[%s2 + $0x258] sm:$0xf]
  %v186 = vld [vmem:[%s2 + $0x25c] sm:$0xf]
  %v187 = vld [vmem:[%s2 + $0x260] sm:$0xf]
  %v188 = vld [vmem:[%s2 + $0x264] sm:$0xf]
  %v189 = vld [vmem:[%s2 + $0x268] sm:$0xf]
  %v190 = vld [vmem:[%s2 + $0x26c] sm:$0xf]
  %v191 = vld [vmem:[%s2 + $0x270] sm:$0xf]
  %v192 = vld [vmem:[%s2 + $0x274] sm:$0xf]
  %v193 = vld [vmem:[%s2 + $0x278] sm:$0xf]
  %v194 = vld [vmem:[%s2 + $0x27c] sm:$0xf]
  %v210 = vunpack.c.l.b16 %v17
  %v211 = vunpack.c.h.b16 %v17
  %v212 = vunpack.c.l.b16 %v18
  %v213 = vunpack.c.h.b16 %v18
  %v214 = vunpack.c.l.b16 %v19
  %v215 = vunpack.c.h.b16 %v19
  %v216 = vunpack.c.l.b16 %v20
  %v217 = vunpack.c.h.b16 %v20
  %v218 = vunpack.c.l.b16 %v21
  %v219 = vunpack.c.h.b16 %v21
  %v220 = vunpack.c.l.b16 %v22
  %v221 = vunpack.c.h.b16 %v22
  %v222 = vunpack.c.l.b16 %v23
  %v223 = vunpack.c.h.b16 %v23
  %v224 = vunpack.c.l.b16 %v24
  %v225 = vunpack.c.h.b16 %v24
  %v226 = vunpack.c.l.b16 %v25
  %v227 = vunpack.c.h.b16 %v25
  %v228 = vunpack.c.l.b16 %v26
  %v229 = vunpack.c.h.b16 %v26
  %v230 = vunpack.c.l.b16 %v27
  %v231 = vunpack.c.h.b16 %v27
  %v232 = vunpack.c.l.b16 %v28
  %v233 = vunpack.c.h.b16 %v28
  %v234 = vunpack.c.l.b16 %v29
  %v235 = vunpack.c.h.b16 %v29
  %v236 = vunpack.c.l.b16 %v30
  %v237 = vunpack.c.h.b16 %v30
  %v238 = vunpack.c.l.b16 %v31
  %v239 = vunpack.c.h.b16 %v31
  %v240 = vpack.c.b16 %v220, %v210
  %v241 = vpack.c.b16 %v221, %v211
  %v242 = vpack.c.b16 %v222, %v212
  %v243 = vpack.c.b16 %v223, %v213
  %v244 = vpack.c.b16 %v224, %v214
  %v245 = vpack.c.b16 %v225, %v215
  %v246 = vpack.c.b16 %v226, %v216
  %v247 = vpack.c.b16 %v227, %v217
  %v248 = vpack.c.b16 %v228, %v218
  %v249 = vpack.c.b16 %v229, %v219
  %v250 = vpack.c.b16 %v230, %v230
  %v251 = vpack.c.b16 %v231, %v231
  %v252 = vpack.c.b16 %v232, %v232
  %v253 = vpack.c.b16 %v233, %v233
  %v254 = vpack.c.b16 %v234, %v234
  %v255 = vpack.c.b16 %v235, %v235
  %v256 = vpack.c.b16 %v236, %v236
  %v257 = vpack.c.b16 %v237, %v237
  %v258 = vpack.c.b16 %v238, %v238
  %v259 = vpack.c.b16 %v239, %v239
  %v440 = vunpack.c.l.b16 %v35
  %v441 = vunpack.c.l.b16 %v36
  %v442 = vunpack.c.l.b16 %v37
  %v443 = vunpack.c.l.b16 %v38
  %v444 = vunpack.c.l.b16 %v39
  %v445 = vunpack.c.l.b16 %v40
  %v446 = vunpack.c.l.b16 %v41
  %v447 = vunpack.c.l.b16 %v42
  %v448 = vunpack.c.l.b16 %v43
  %v449 = vunpack.c.l.b16 %v44
  %v450 = vunpack.c.l.b16 %v45
  %v451 = vunpack.c.l.b16 %v46
  %v452 = vunpack.c.l.b16 %v47
  %v453 = vunpack.c.l.b16 %v48
  %v454 = vunpack.c.l.b16 %v49
  %v455 = vunpack.c.l.b16 %v50
  %v456 = vunpack.c.l.b16 %v51
  %v457 = vunpack.c.l.b16 %v52
  %v458 = vunpack.c.l.b16 %v53
  %v459 = vunpack.c.l.b16 %v54
  %v460 = vunpack.c.l.b16 %v55
  %v461 = vunpack.c.l.b16 %v56
  %v462 = vunpack.c.l.b16 %v57
  %v463 = vunpack.c.l.b16 %v58
  %v464 = vunpack.c.l.b16 %v59
  %v465 = vunpack.c.l.b16 %v60
  %v466 = vunpack.c.l.b16 %v61
  %v467 = vunpack.c.l.b16 %v62
  %v468 = vunpack.c.l.b16 %v63
  %v469 = vunpack.c.l.b16 %v64
  %v470 = vunpack.c.l.b16 %v65
  %v471 = vunpack.c.l.b16 %v66
  %v472 = vunpack.c.l.b16 %v67
  %v473 = vunpack.c.l.b16 %v68
  %v474 = vunpack.c.l.b16 %v69
  %v475 = vunpack.c.l.b16 %v70
  %v476 = vunpack.c.l.b16 %v71
  %v477 = vunpack.c.l.b16 %v72
  %v478 = vunpack.c.l.b16 %v73
  %v479 = vunpack.c.l.b16 %v74
  %v480 = vunpack.c.l.b16 %v75
  %v481 = vunpack.c.l.b16 %v76
  %v482 = vunpack.c.l.b16 %v77
  %v483 = vunpack.c.l.b16 %v78
  %v484 = vunpack.c.l.b16 %v79
  %v485 = vunpack.c.l.b16 %v80
  %v486 = vunpack.c.l.b16 %v81
  %v487 = vunpack.c.l.b16 %v82
  %v488 = vunpack.c.l.b16 %v83
  %v489 = vunpack.c.l.b16 %v84
  %v490 = vunpack.c.l.b16 %v85
  %v491 = vunpack.c.l.b16 %v86
  %v492 = vunpack.c.l.b16 %v87
  %v493 = vunpack.c.l.b16 %v88
  %v494 = vunpack.c.l.b16 %v89
  %v495 = vunpack.c.l.b16 %v90
  %v496 = vunpack.c.l.b16 %v91
  %v497 = vunpack.c.l.b16 %v92
  %v498 = vunpack.c.l.b16 %v93
  %v499 = vunpack.c.l.b16 %v94
  %v500 = vunpack.c.l.b16 %v95
  %v501 = vunpack.c.l.b16 %v96
  %v502 = vunpack.c.l.b16 %v97
  %v503 = vunpack.c.l.b16 %v98
  %v504 = vunpack.c.l.b16 %v99
  %v505 = vunpack.c.l.b16 %v100
  %v506 = vunpack.c.l.b16 %v101
  %v507 = vunpack.c.l.b16 %v102
  %v508 = vunpack.c.l.b16 %v103
  %v509 = vunpack.c.l.b16 %v104
  %v510 = vunpack.c.l.b16 %v105
  %v511 = vunpack.c.l.b16 %v106
  %v512 = vunpack.c.l.b16 %v107
  %v513 = vunpack.c.l.b16 %v108
  %v514 = vunpack.c.l.b16 %v109
  %v515 = vunpack.c.l.b16 %v110
  %v516 = vunpack.c.l.b16 %v111
  %v517 = vunpack.c.l.b16 %v112
  %v518 = vunpack.c.l.b16 %v113
  %v519 = vunpack.c.l.b16 %v114
  %v520 = vunpack.c.l.b16 %v115
  %v521 = vunpack.c.l.b16 %v116
  %v522 = vunpack.c.l.b16 %v117
  %v523 = vunpack.c.l.b16 %v118
  %v524 = vunpack.c.l.b16 %v119
  %v525 = vunpack.c.l.b16 %v120
  %v526 = vunpack.c.l.b16 %v121
  %v527 = vunpack.c.l.b16 %v122
  %v528 = vunpack.c.l.b16 %v123
  %v529 = vunpack.c.l.b16 %v124
  %v530 = vunpack.c.l.b16 %v125
  %v531 = vunpack.c.l.b16 %v126
  %v532 = vunpack.c.l.b16 %v127
  %v533 = vunpack.c.l.b16 %v128
  %v534 = vunpack.c.l.b16 %v129
  %v535 = vunpack.c.l.b16 %v130
  %v536 = vunpack.c.l.b16 %v131
  %v537 = vunpack.c.l.b16 %v132
  %v538 = vunpack.c.l.b16 %v133
  %v539 = vunpack.c.l.b16 %v134
  %v540 = vunpack.c.l.b16 %v135
  %v541 = vunpack.c.l.b16 %v136
  %v542 = vunpack.c.l.b16 %v137
  %v543 = vunpack.c.l.b16 %v138
  %v544 = vunpack.c.l.b16 %v139
  %v545 = vunpack.c.l.b16 %v140
  %v546 = vunpack.c.l.b16 %v141
  %v547 = vunpack.c.l.b16 %v142
  %v548 = vunpack.c.l.b16 %v143
  %v549 = vunpack.c.l.b16 %v144
  %v550 = vunpack.c.l.b16 %v145
  %v551 = vunpack.c.l.b16 %v146
  %v552 = vunpack.c.l.b16 %v147
  %v553 = vunpack.c.l.b16 %v148
  %v554 = vunpack.c.l.b16 %v149
  %v555 = vunpack.c.l.b16 %v150
  %v556 = vunpack.c.l.b16 %v151
  %v557 = vunpack.c.l.b16 %v152
  %v558 = vunpack.c.l.b16 %v153
  %v559 = vunpack.c.l.b16 %v154
  %v560 = vunpack.c.l.b16 %v155
  %v561 = vunpack.c.l.b16 %v156
  %v562 = vunpack.c.l.b16 %v157
  %v563 = vunpack.c.l.b16 %v158
  %v564 = vunpack.c.l.b16 %v159
  %v565 = vunpack.c.l.b16 %v160
  %v566 = vunpack.c.l.b16 %v161
  %v567 = vunpack.c.l.b16 %v162
  %v568 = vunpack.c.l.b16 %v163
  %v569 = vunpack.c.l.b16 %v164
  %v570 = vunpack.c.l.b16 %v165
  %v571 = vunpack.c.l.b16 %v166
  %v572 = vunpack.c.l.b16 %v167
  %v573 = vunpack.c.l.b16 %v168
  %v574 = vunpack.c.l.b16 %v169
  %v575 = vunpack.c.l.b16 %v170
  %v576 = vunpack.c.l.b16 %v171
  %v577 = vunpack.c.l.b16 %v172
  %v578 = vunpack.c.l.b16 %v173
  %v579 = vunpack.c.l.b16 %v174
  %v580 = vunpack.c.l.b16 %v175
  %v581 = vunpack.c.l.b16 %v176
  %v582 = vunpack.c.l.b16 %v177
  %v583 = vunpack.c.l.b16 %v178
  %v584 = vunpack.c.l.b16 %v179
  %v585 = vunpack.c.l.b16 %v180
  %v586 = vunpack.c.l.b16 %v181
  %v587 = vunpack.c.l.b16 %v182
  %v588 = vunpack.c.l.b16 %v183
  %v589 = vunpack.c.l.b16 %v184
  %v590 = vunpack.c.l.b16 %v185
  %v591 = vunpack.c.l.b16 %v186
  %v592 = vunpack.c.l.b16 %v187
  %v593 = vunpack.c.l.b16 %v188
  %v594 = vunpack.c.l.b16 %v189
  %v595 = vunpack.c.l.b16 %v190
  %v596 = vunpack.c.l.b16 %v191
  %v597 = vunpack.c.l.b16 %v192
  %v598 = vunpack.c.l.b16 %v193
  %v599 = vunpack.c.l.b16 %v194
  %v600 = vpack.c.b16 %v441, %v440
  %v601 = vpack.c.b16 %v443, %v442
  %v602 = vpack.c.b16 %v445, %v444
  %v603 = vpack.c.b16 %v447, %v446
  %v604 = vpack.c.b16 %v449, %v448
  %v605 = vpack.c.b16 %v451, %v450
  %v606 = vpack.c.b16 %v453, %v452
  %v607 = vpack.c.b16 %v455, %v454
  %v608 = vpack.c.b16 %v457, %v456
  %v609 = vpack.c.b16 %v459, %v458
  %v610 = vpack.c.b16 %v461, %v460
  %v611 = vpack.c.b16 %v463, %v462
  %v612 = vpack.c.b16 %v465, %v464
  %v613 = vpack.c.b16 %v467, %v466
  %v614 = vpack.c.b16 %v469, %v468
  %v615 = vpack.c.b16 %v471, %v470
  %v616 = vpack.c.b16 %v473, %v472
  %v617 = vpack.c.b16 %v475, %v474
  %v618 = vpack.c.b16 %v477, %v476
  %v619 = vpack.c.b16 %v479, %v478
  %v620 = vpack.c.b16 %v481, %v480
  %v621 = vpack.c.b16 %v483, %v482
  %v622 = vpack.c.b16 %v485, %v484
  %v623 = vpack.c.b16 %v487, %v486
  %v624 = vpack.c.b16 %v489, %v488
  %v625 = vpack.c.b16 %v491, %v490
  %v626 = vpack.c.b16 %v493, %v492
  %v627 = vpack.c.b16 %v495, %v494
  %v628 = vpack.c.b16 %v497, %v496
  %v629 = vpack.c.b16 %v499, %v498
  %v630 = vpack.c.b16 %v501, %v500
  %v631 = vpack.c.b16 %v503, %v502
  %v632 = vpack.c.b16 %v505, %v504
  %v633 = vpack.c.b16 %v507, %v506
  %v634 = vpack.c.b16 %v509, %v508
  %v635 = vpack.c.b16 %v511, %v510
  %v636 = vpack.c.b16 %v513, %v512
  %v637 = vpack.c.b16 %v515, %v514
  %v638 = vpack.c.b16 %v517, %v516
  %v639 = vpack.c.b16 %v519, %v518
  %v640 = vpack.c.b16 %v521, %v520
  %v641 = vpack.c.b16 %v523, %v522
  %v642 = vpack.c.b16 %v525, %v524
  %v643 = vpack.c.b16 %v527, %v526
  %v644 = vpack.c.b16 %v529, %v528
  %v645 = vpack.c.b16 %v531, %v530
  %v646 = vpack.c.b16 %v533, %v532
  %v647 = vpack.c.b16 %v535, %v534
  %v648 = vpack.c.b16 %v537, %v536
  %v649 = vpack.c.b16 %v539, %v538
  %v650 = vpack.c.b16 %v541, %v540
  %v651 = vpack.c.b16 %v543, %v542
  %v652 = vpack.c.b16 %v545, %v544
  %v653 = vpack.c.b16 %v547, %v546
  %v654 = vpack.c.b16 %v549, %v548
  %v655 = vpack.c.b16 %v551, %v550
  %v656 = vpack.c.b16 %v553, %v552
  %v657 = vpack.c.b16 %v555, %v554
  %v658 = vpack.c.b16 %v557, %v556
  %v659 = vpack.c.b16 %v559, %v558
  %v660 = vpack.c.b16 %v561, %v560
  %v661 = vpack.c.b16 %v563, %v562
  %v662 = vpack.c.b16 %v565, %v564
  %v663 = vpack.c.b16 %v567, %v566
  %v664 = vpack.c.b16 %v569, %v568
  %v665 = vpack.c.b16 %v571, %v570
  %v666 = vpack.c.b16 %v573, %v572
  %v667 = vpack.c.b16 %v575, %v574
  %v668 = vpack.c.b16 %v577, %v576
  %v669 = vpack.c.b16 %v579, %v578
  %v670 = vpack.c.b16 %v581, %v580
  %v671 = vpack.c.b16 %v583, %v582
  %v672 = vpack.c.b16 %v585, %v584
  %v673 = vpack.c.b16 %v587, %v586
  %v674 = vpack.c.b16 %v589, %v588
  %v675 = vpack.c.b16 %v591, %v590
  %v676 = vpack.c.b16 %v593, %v592
  %v677 = vpack.c.b16 %v595, %v594
  %v678 = vpack.c.b16 %v597, %v596
  %v679 = vpack.c.b16 %v599, %v598
  %760 = vmatpush.bf16.msra.mxu0 %v607
  %761 = vmatpush.bf16.msra.mxu0 %v606
  %762 = vmatpush.bf16.msra.mxu0 %v605
  %763 = vmatpush.bf16.msra.mxu0 %v604
  %764 = vmatpush.bf16.msra.mxu0 %v603
  %765 = vmatpush.bf16.msra.mxu0 %v602
  %766 = vmatpush.bf16.msra.mxu0 %v601
  %767 = vmatpush.bf16.msra.mxu0 %v600
  %768 = vmatmul.bf16.gmra.mxu0 %v240
  %v769 = vpop.f32.mrf.mxu0
  %v770 = vadd.f32 0.0, %v769
  %v771 = vpop.f32.mrf.mxu0
  %v772 = vadd.f32 0.0, %v771
  %773 = vmatmul.bf16.gmra.mxu0 %v250
  %v774 = vpop.f32.mrf.mxu0
  %v775 = vadd.f32 0.0, %v774
  %v776 = vpop.f32.mrf.mxu0
  %777 = vdwg.mxu0
  %778 = vmatpush.bf16.msra.mxu0 %v615
  %779 = vmatpush.bf16.msra.mxu0 %v614
  %780 = vmatpush.bf16.msra.mxu0 %v613
  %781 = vmatpush.bf16.msra.mxu0 %v612
  %782 = vmatpush.bf16.msra.mxu0 %v611
  %783 = vmatpush.bf16.msra.mxu0 %v610
  %784 = vmatpush.bf16.msra.mxu0 %v609
  %785 = vmatpush.bf16.msra.mxu0 %v608
  %786 = vmatmul.bf16.gmra.mxu0 %v241
  %v787 = vpop.f32.mrf.mxu0
  %v788 = vadd.f32 %v770, %v787
  %v789 = vpop.f32.mrf.mxu0
  %v790 = vadd.f32 %v772, %v789
  %791 = vmatmul.bf16.gmra.mxu0 %v251
  %v792 = vpop.f32.mrf.mxu0
  %v793 = vadd.f32 %v775, %v792
  %v794 = vpop.f32.mrf.mxu0
  %795 = vdwg.mxu0
  %796 = vmatpush.bf16.msra.mxu0 %v623
  %797 = vmatpush.bf16.msra.mxu0 %v622
  %798 = vmatpush.bf16.msra.mxu0 %v621
  %799 = vmatpush.bf16.msra.mxu0 %v620
  %800 = vmatpush.bf16.msra.mxu0 %v619
  %801 = vmatpush.bf16.msra.mxu0 %v618
  %802 = vmatpush.bf16.msra.mxu0 %v617
  %803 = vmatpush.bf16.msra.mxu0 %v616
  %804 = vmatmul.bf16.gmra.mxu0 %v242
  %v805 = vpop.f32.mrf.mxu0
  %v806 = vadd.f32 %v788, %v805
  %v807 = vpop.f32.mrf.mxu0
  %v808 = vadd.f32 %v790, %v807
  %809 = vmatmul.bf16.gmra.mxu0 %v252
  %v810 = vpop.f32.mrf.mxu0
  %v811 = vadd.f32 %v793, %v810
  %v812 = vpop.f32.mrf.mxu0
  %813 = vdwg.mxu0
  %814 = vmatpush.bf16.msra.mxu0 %v631
  %815 = vmatpush.bf16.msra.mxu0 %v630
  %816 = vmatpush.bf16.msra.mxu0 %v629
  %817 = vmatpush.bf16.msra.mxu0 %v628
  %818 = vmatpush.bf16.msra.mxu0 %v627
  %819 = vmatpush.bf16.msra.mxu0 %v626
  %820 = vmatpush.bf16.msra.mxu0 %v625
  %821 = vmatpush.bf16.msra.mxu0 %v624
  %822 = vmatmul.bf16.gmra.mxu0 %v243
  %v823 = vpop.f32.mrf.mxu0
  %v824 = vadd.f32 %v806, %v823
  %v825 = vpop.f32.mrf.mxu0
  %v826 = vadd.f32 %v808, %v825
  %827 = vmatmul.bf16.gmra.mxu0 %v253
  %v828 = vpop.f32.mrf.mxu0
  %v829 = vadd.f32 %v811, %v828
  %v830 = vpop.f32.mrf.mxu0
  %831 = vdwg.mxu0
  %832 = vmatpush.bf16.msra.mxu0 %v639
  %833 = vmatpush.bf16.msra.mxu0 %v638
  %834 = vmatpush.bf16.msra.mxu0 %v637
  %835 = vmatpush.bf16.msra.mxu0 %v636
  %836 = vmatpush.bf16.msra.mxu0 %v635
  %837 = vmatpush.bf16.msra.mxu0 %v634
  %838 = vmatpush.bf16.msra.mxu0 %v633
  %839 = vmatpush.bf16.msra.mxu0 %v632
  %840 = vmatmul.bf16.gmra.mxu0 %v244
  %v841 = vpop.f32.mrf.mxu0
  %v842 = vadd.f32 %v824, %v841
  %v843 = vpop.f32.mrf.mxu0
  %v844 = vadd.f32 %v826, %v843
  %845 = vmatmul.bf16.gmra.mxu0 %v254
  %v846 = vpop.f32.mrf.mxu0
  %v847 = vadd.f32 %v829, %v846
  %v848 = vpop.f32.mrf.mxu0
  %849 = vdwg.mxu0
  %850 = vmatpush.bf16.msra.mxu0 %v647
  %851 = vmatpush.bf16.msra.mxu0 %v646
  %852 = vmatpush.bf16.msra.mxu0 %v645
  %853 = vmatpush.bf16.msra.mxu0 %v644
  %854 = vmatpush.bf16.msra.mxu0 %v643
  %855 = vmatpush.bf16.msra.mxu0 %v642
  %856 = vmatpush.bf16.msra.mxu0 %v641
  %857 = vmatpush.bf16.msra.mxu0 %v640
  %858 = vmatmul.bf16.gmra.mxu0 %v245
  %v859 = vpop.f32.mrf.mxu0
  %v860 = vadd.f32 %v842, %v859
  %v861 = vpop.f32.mrf.mxu0
  %v862 = vadd.f32 %v844, %v861
  %863 = vmatmul.bf16.gmra.mxu0 %v255
  %v864 = vpop.f32.mrf.mxu0
  %v865 = vadd.f32 %v847, %v864
  %v866 = vpop.f32.mrf.mxu0
  %867 = vdwg.mxu0
  %868 = vmatpush.bf16.msra.mxu0 %v655
  %869 = vmatpush.bf16.msra.mxu0 %v654
  %870 = vmatpush.bf16.msra.mxu0 %v653
  %871 = vmatpush.bf16.msra.mxu0 %v652
  %872 = vmatpush.bf16.msra.mxu0 %v651
  %873 = vmatpush.bf16.msra.mxu0 %v650
  %874 = vmatpush.bf16.msra.mxu0 %v649
  %875 = vmatpush.bf16.msra.mxu0 %v648
  %876 = vmatmul.bf16.gmra.mxu0 %v246
  %v877 = vpop.f32.mrf.mxu0
  %v878 = vadd.f32 %v860, %v877
  %v879 = vpop.f32.mrf.mxu0
  %v880 = vadd.f32 %v862, %v879
  %881 = vmatmul.bf16.gmra.mxu0 %v256
  %v882 = vpop.f32.mrf.mxu0
  %v883 = vadd.f32 %v865, %v882
  %v884 = vpop.f32.mrf.mxu0
  %885 = vdwg.mxu0
  %886 = vmatpush.bf16.msra.mxu0 %v663
  %887 = vmatpush.bf16.msra.mxu0 %v662
  %888 = vmatpush.bf16.msra.mxu0 %v661
  %889 = vmatpush.bf16.msra.mxu0 %v660
  %890 = vmatpush.bf16.msra.mxu0 %v659
  %891 = vmatpush.bf16.msra.mxu0 %v658
  %892 = vmatpush.bf16.msra.mxu0 %v657
  %893 = vmatpush.bf16.msra.mxu0 %v656
  %894 = vmatmul.bf16.gmra.mxu0 %v247
  %v895 = vpop.f32.mrf.mxu0
  %v896 = vadd.f32 %v878, %v895
  %v897 = vpop.f32.mrf.mxu0
  %v898 = vadd.f32 %v880, %v897
  %899 = vmatmul.bf16.gmra.mxu0 %v257
  %v900 = vpop.f32.mrf.mxu0
  %v901 = vadd.f32 %v883, %v900
  %v902 = vpop.f32.mrf.mxu0
  %903 = vdwg.mxu0
  %904 = vmatpush.bf16.msra.mxu0 %v671
  %905 = vmatpush.bf16.msra.mxu0 %v670
  %906 = vmatpush.bf16.msra.mxu0 %v669
  %907 = vmatpush.bf16.msra.mxu0 %v668
  %908 = vmatpush.bf16.msra.mxu0 %v667
  %909 = vmatpush.bf16.msra.mxu0 %v666
  %910 = vmatpush.bf16.msra.mxu0 %v665
  %911 = vmatpush.bf16.msra.mxu0 %v664
  %912 = vmatmul.bf16.gmra.mxu0 %v248
  %v913 = vpop.f32.mrf.mxu0
  %v914 = vadd.f32 %v896, %v913
  %v915 = vpop.f32.mrf.mxu0
  %v916 = vadd.f32 %v898, %v915
  %917 = vmatmul.bf16.gmra.mxu0 %v258
  %v918 = vpop.f32.mrf.mxu0
  %v919 = vadd.f32 %v901, %v918
  %v920 = vpop.f32.mrf.mxu0
  %921 = vdwg.mxu0
  %922 = vmatpush.bf16.msra.mxu0 %v679
  %923 = vmatpush.bf16.msra.mxu0 %v678
  %924 = vmatpush.bf16.msra.mxu0 %v677
  %925 = vmatpush.bf16.msra.mxu0 %v676
  %926 = vmatpush.bf16.msra.mxu0 %v675
  %927 = vmatpush.bf16.msra.mxu0 %v674
  %928 = vmatpush.bf16.msra.mxu0 %v673
  %929 = vmatpush.bf16.msra.mxu0 %v672
  %930 = vmatmul.bf16.gmra.mxu0 %v249
  %v931 = vpop.f32.mrf.mxu0
  %v932 = vadd.f32 %v914, %v931
  %v933 = vpop.f32.mrf.mxu0
  %v934 = vadd.f32 %v916, %v933
  %935 = vmatmul.bf16.gmra.mxu0 %v259
  %v936 = vpop.f32.mrf.mxu0
  %v937 = vadd.f32 %v919, %v936
  %v938 = vpop.f32.mrf.mxu0
  %939 = vdwg.mxu0
  %v940 = vmax.f32 %v932, 0.0
  %v941 = vmax.f32 %v934, 0.0
  %v942 = vmax.f32 %v937, 0.0
  %v943 = vld [vmem:[%s3] sm:$0xff]
  %v944 = vld [vmem:[%s3 + $0x8] sm:$0xff]
  %v945 = vld [vmem:[%s3 + $0x10] sm:$0xff]
  %v946 = vld [vmem:[%s3 + $0x18] sm:$0xff]
  %v947 = vld [vmem:[%s3 + $0x20] sm:$0xff]
  %v948 = vld [vmem:[%s3 + $0x28] sm:$0xff]
  %v949 = vld [vmem:[%s3 + $0x30] sm:$0xff]
  %v950 = vld [vmem:[%s3 + $0x38] sm:$0xff]
  %v951 = vld [vmem:[%s3 + $0x40] sm:$0x1]
  %v952 = vperm.slane %v951, 0
  %vm953 = vcmask 523264
  %v955 = vsel %vm953, %v940, 0
  %v958 = vsel %vm953, %v941, 0
  %v961 = vsel %vm953, %v942, 0
  %963 = vmatpush.msra.mxu0 0.0
  %964 = vmatpush.msra.mxu0 0.0
  %965 = vmatpush.msra.mxu0 0.0
  %966 = vmatpush.msra.mxu0 0.0
  %967 = vmatpush.msra.mxu0 0.0
  %968 = vmatpush.msra.mxu0 0.0
  %969 = vmatpush.msra.mxu0 0.0
  %970 = vmatpush.msra.mxu0 0.0
  %971 = vmatpush.msra.mxu0 %v950
  %972 = vmatpush.msra.mxu0 %v949
  %973 = vmatpush.msra.mxu0 %v948
  %974 = vmatpush.msra.mxu0 %v947
  %975 = vmatpush.msra.mxu0 %v946
  %976 = vmatpush.msra.mxu0 %v945
  %977 = vmatpush.msra.mxu0 %v944
  %978 = vmatpush.msra.mxu0 %v943
  %979 = vmatmul.f32.gmra.mxu0 %v955
  %v980 = vpop.f32.mrf.mxu0
  %v981 = vadd.f32 %v952, %v980
  %982 = vmatmul.f32.gmra.mxu0 %v958
  %v983 = vpop.f32.mrf.mxu0
  %v984 = vadd.f32 %v952, %v983
  %985 = vmatmul.f32.gmra.mxu0 %v961
  %v986 = vpop.f32.mrf.mxu0
  %v987 = vadd.f32 %v952, %v986
  %988 = vdwg.mxu0
  %v989 = vlaneseq
  %v990 = vshrl.u32 %v989, 7
  %v991 = vadd.s32 %v990, 8
  %v992 = vadd.s32 %v990, 16
  %vm993 = vcmp.ge.s32.totalorder %v990, 5
  %vm994 = vcmp.ge.s32.totalorder %v991, 5
  %vm995 = vcmp.ge.s32.totalorder %v992, 5
  %v996 = vsel %vm993, 1, 0
  %v997 = vsel %vm994, 1, 0
  %v998 = vsel %vm995, 1, 0
  %vm999 = vcmp.ge.s32.totalorder %v990, 10
  %vm1000 = vcmp.ge.s32.totalorder %v991, 10
  %vm1001 = vcmp.ge.s32.totalorder %v992, 10
  %v1002 = vsel %vm999, 1, 0
  %v1003 = vsel %vm1000, 1, 0
  %v1004 = vsel %vm1001, 1, 0
  %v1005 = vadd.s32 %v996, %v1002
  %v1006 = vadd.s32 %v997, %v1003
  %v1007 = vadd.s32 %v998, %v1004
  %vm1008 = vcmp.ge.s32.totalorder %v990, 15
  %vm1009 = vcmp.ge.s32.totalorder %v991, 15
  %vm1010 = vcmp.ge.s32.totalorder %v992, 15
  %v1011 = vsel %vm1008, 1, 0
  %v1012 = vsel %vm1009, 1, 0
  %v1013 = vsel %vm1010, 1, 0
  %v1014 = vadd.s32 %v1005, %v1011
  %v1015 = vadd.s32 %v1006, %v1012
  %v1016 = vadd.s32 %v1007, %v1013
  %v1017 = vmul.u32 %v1014, 5
  %v1018 = vmul.u32 %v1015, 5
  %v1019 = vmul.u32 %v1016, 5
  %v1020 = vadd.s32 %v1017, %v32
  %v1021 = vadd.s32 %v1018, %v33
  %v1022 = vadd.s32 %v1019, %v34
  %v1023 = vlaneseq
  %v1024 = vand.u32 %v1023, 127
  %1025 = vset.pattern.permute.xlu0 0
  %1026 = vperm.xlu0 %1025, %v32
  %v1027 = vpop.permute.xlu0 %1026
  %1028 = vset.pattern.permute.xlu0 0
  %1029 = vperm.xlu0 %1028, %v33
  %v1030 = vpop.permute.xlu0 %1029
  %1031 = vset.pattern.permute.xlu0 0
  %1032 = vperm.xlu0 %1031, %v34
  %v1033 = vpop.permute.xlu0 %1032
  %vm1034 = vcmp.eq.s32.totalorder %v1024, %v1027
  %vm1035 = vcmp.eq.s32.totalorder %v1024, %v1030
  %vm1036 = vcmp.eq.s32.totalorder %v1024, %v1033
  %v1037 = vsel %vm1034, 1, 0
  %v1038 = vsel %vm1035, 1, 0
  %v1039 = vsel %vm1036, 1, 0
  %v1040 = vcvt.s32.f32 %v1037
  %v1041 = vcvt.s32.f32 %v1038
  %v1042 = vcvt.s32.f32 %v1039
  %1043 = vset.pattern.permute.xlu0 0
  %1044 = vperm.xlu0 %1043, %v1020
  %v1045 = vpop.permute.xlu0 %1044
  %1046 = vset.pattern.permute.xlu0 0
  %1047 = vperm.xlu0 %1046, %v1021
  %v1048 = vpop.permute.xlu0 %1047
  %1049 = vset.pattern.permute.xlu0 0
  %1050 = vperm.xlu0 %1049, %v1022
  %v1051 = vpop.permute.xlu0 %1050
  %vm1052 = vcmp.eq.s32.totalorder %v1024, %v1045
  %vm1053 = vcmp.eq.s32.totalorder %v1024, %v1048
  %vm1054 = vcmp.eq.s32.totalorder %v1024, %v1051
  %v1055 = vsel %vm1052, 1, 0
  %v1056 = vsel %vm1053, 1, 0
  %v1057 = vsel %vm1054, 1, 0
  %v1058 = vcvt.s32.f32 %v1055
  %v1059 = vcvt.s32.f32 %v1056
  %v1060 = vcvt.s32.f32 %v1057
  %vm1061 = vcmp.eq.s32.totalorder %v1024, %v1014
  %vm1062 = vcmp.eq.s32.totalorder %v1024, %v1015
  %vm1063 = vcmp.eq.s32.totalorder %v1024, %v1016
  %v1064 = vsel %vm1061, 1, 0
  %v1065 = vsel %vm1062, 1, 0
  %v1066 = vsel %vm1063, 1, 0
  %v1067 = vcvt.s32.f32 %v1064
  %v1068 = vcvt.s32.f32 %v1065
  %v1069 = vcvt.s32.f32 %v1066
  %vm1070 = vcmp.lt.s32.totalorder %v990, 2
  %v1071 = vmul.u32 %v990, 5
  %v1072 = vsub.s32 %v990, 2
  %v1073 = vmul.u32 %v1072, 5
  %v1074 = vadd.s32 %v1073, 10
  %v1075 = vsel %vm1070, %v1071, %v1074
  %vm1076 = vcmp.ge.s32.totalorder %v1024, %v1075
  %v1077 = vadd.s32 %v1075, 5
  %vm1078 = vcmp.lt.s32.totalorder %v1024, %v1077
  %vm1079 = vmand %vm1076, %vm1078
  %v1080 = vsel %vm1079, 1, 0
  %v1081 = vcvt.s32.f32 %v1080
  %vm1082 = vcmp.ge.s32.totalorder %v990, 2
  %v1083 = vsel %vm1082, 1, 0
  %v1084 = vcvt.s32.f32 %v1083
  %vm1085 = vcmask 39936
  %v1086 = vsel %vm1085, %v981, -inf
  %1087 = vmax.xlane.f32.xlu0 %v1086
  %v1088 = vpop.xlane.xlu0 %1087
  %v1089 = vsel %vm1085, %v984, -inf
  %1090 = vmax.xlane.f32.xlu0 %v1089
  %v1091 = vpop.xlane.xlu0 %1090
  %vm1092 = vcmask 35840
  %v1093 = vsel %vm1092, %v987, -inf
  %1094 = vmax.xlane.f32.xlu0 %v1093
  %v1095 = vpop.xlane.xlu0 %1094
  %v1096 = vsub.f32 %v981, %v1088
  %v1097 = vsub.f32 %v984, %v1091
  %v1098 = vsub.f32 %v987, %v1095
  %v1099 = vmul.f32 %v1096, 1.442695
  %v1100 = vpow.pop %v1099
  %v1101 = vmul.f32 %v1097, 1.442695
  %v1102 = vpow.pop %v1101
  %v1103 = vmul.f32 %v1098, 1.442695
  %v1104 = vpow.pop %v1103
  %v1105 = vsel %vm1085, %v1100, 0.0
  %1106 = vadd.xlane.f32.xlu0 %v1105
  %v1107 = vpop.xlane.xlu0 %1106
  %v1108 = vsel %vm1085, %v1102, 0.0
  %1109 = vadd.xlane.f32.xlu0 %v1108
  %v1110 = vpop.xlane.xlu0 %1109
  %v1111 = vsel %vm1092, %v1104, 0.0
  %1112 = vadd.xlane.f32.xlu0 %v1111
  %v1113 = vpop.xlane.xlu0 %1112
  %v1114 = vlog2.pop %v1107
  %v1115 = vmul.f32 %v1114, 0.6931472
  %v1116 = vlog2.pop %v1110
  %v1117 = vmul.f32 %v1116, 0.6931472
  %v1118 = vlog2.pop %v1113
  %v1119 = vmul.f32 %v1118, 0.6931472
  %v1120 = vadd.f32 %v1115, %v1088
  %v1121 = vadd.f32 %v1117, %v1091
  %v1122 = vadd.f32 %v1119, %v1095
  %v1123 = vsub.f32 %v1120, %v981
  %v1124 = vsub.f32 %v1121, %v984
  %v1125 = vsub.f32 %v1122, %v987
  %v1126 = vmul.f32 %v1123, %v1040
  %v1127 = vmul.f32 %v1124, %v1041
  %v1128 = vmul.f32 %v1125, %v1042
  %v1129 = vsel %vm1085, %v1126, 0.0
  %1130 = vadd.xlane.f32.xlu0 %v1129
  %v1131 = vpop.xlane.xlu0 %1130
  %v1132 = vsel %vm1085, %v1127, 0.0
  %1133 = vadd.xlane.f32.xlu0 %v1132
  %v1134 = vpop.xlane.xlu0 %1133
  %v1135 = vsel %vm1092, %v1128, 0.0
  %1136 = vadd.xlane.f32.xlu0 %v1135
  %v1137 = vpop.xlane.xlu0 %1136
  %vm1138 = vcmp.ge.f32.partialorder %v981, %v1088
  %vm1139 = vcmp.ge.f32.partialorder %v984, %v1091
  %vm1140 = vcmp.ge.f32.partialorder %v987, %v1095
  %v1141 = vsel %vm1138, %v1024, 5
  %v1142 = vsel %vm1139, %v1024, 5
  %v1143 = vsel %vm1140, %v1024, 5
  %v1144 = vsel %vm1085, %v1141, 2147483647
  %v1145 = vand.u32 %v1144, 65535
  %v1146 = vshra.s32 %v1144, 16
  %v1147 = vcvt.s32.f32 %v1145
  %v1148 = vcvt.s32.f32 %v1146
  %1149 = vmin.xlane.f32.xlu0 %v1148
  %v1150 = vpop.xlane.xlu0 %1149
  %vm1151 = vcmp.eq.f32.partialorder %v1148, %v1150
  %v1152 = vsel %vm1151, %v1147, inf
  %1153 = vmin.xlane.f32.xlu0 %v1152
  %v1154 = vpop.xlane.xlu0 %1153
  %v1155 = vcvt.f32.s32 %v1154
  %v1156 = vcvt.f32.s32 %v1150
  %v1157 = vshll.u32 %v1156, 16
  %v1158 = vadd.s32 %v1157, %v1155
  %v1159 = vsel %vm1085, %v1142, 2147483647
  %v1160 = vand.u32 %v1159, 65535
  %v1161 = vshra.s32 %v1159, 16
  %v1162 = vcvt.s32.f32 %v1160
  %v1163 = vcvt.s32.f32 %v1161
  %1164 = vmin.xlane.f32.xlu0 %v1163
  %v1165 = vpop.xlane.xlu0 %1164
  %vm1166 = vcmp.eq.f32.partialorder %v1163, %v1165
  %v1167 = vsel %vm1166, %v1162, inf
  %1168 = vmin.xlane.f32.xlu0 %v1167
  %v1169 = vpop.xlane.xlu0 %1168
  %v1170 = vcvt.f32.s32 %v1169
  %v1171 = vcvt.f32.s32 %v1165
  %v1172 = vshll.u32 %v1171, 16
  %v1173 = vadd.s32 %v1172, %v1170
  %v1174 = vsel %vm1092, %v1143, 2147483647
  %v1175 = vand.u32 %v1174, 65535
  %v1176 = vshra.s32 %v1174, 16
  %v1177 = vcvt.s32.f32 %v1175
  %v1178 = vcvt.s32.f32 %v1176
  %1179 = vmin.xlane.f32.xlu0 %v1178
  %v1180 = vpop.xlane.xlu0 %1179
  %vm1181 = vcmp.eq.f32.partialorder %v1178, %v1180
  %v1182 = vsel %vm1181, %v1177, inf
  %1183 = vmin.xlane.f32.xlu0 %v1182
  %v1184 = vpop.xlane.xlu0 %1183
  %v1185 = vcvt.f32.s32 %v1184
  %v1186 = vcvt.f32.s32 %v1180
  %v1187 = vshll.u32 %v1186, 16
  %v1188 = vadd.s32 %v1187, %v1185
  %vm1189 = vcmp.eq.s32.totalorder %v1158, %v32
  %vm1190 = vcmp.eq.s32.totalorder %v1173, %v33
  %vm1191 = vcmp.eq.s32.totalorder %v1188, %v34
  %v1192 = vsel %vm1189, 1, 0
  %v1193 = vsel %vm1190, 1, 0
  %v1194 = vsel %vm1191, 1, 0
  %v1195 = vcvt.s32.f32 %v1192
  %v1196 = vcvt.s32.f32 %v1193
  %v1197 = vcvt.s32.f32 %v1194
  %1198 = vxpose.xlu0.b32.start [1/16] %v1058, 128
  %1199 = vxpose.xlu0.b32.cont [2/16] %v1059, 128
  %1200 = vxpose.xlu0.b32.cont [3/16] %v1060, 128
  %1201 = vxpose.xlu0.b32.cont [4/16] 0.0, 128
  %1202 = vxpose.xlu0.b32.cont [5/16] 0.0, 128
  %1203 = vxpose.xlu0.b32.cont [6/16] 0.0, 128
  %1204 = vxpose.xlu0.b32.cont [7/16] 0.0, 128
  %1205 = vxpose.xlu0.b32.cont [8/16] 0.0, 128
  %1206 = vxpose.xlu0.b32.cont [9/16] 0.0, 128
  %1207 = vxpose.xlu0.b32.cont [10/16] 0.0, 128
  %1208 = vxpose.xlu0.b32.cont [11/16] 0.0, 128
  %1209 = vxpose.xlu0.b32.cont [12/16] 0.0, 128
  %1210 = vxpose.xlu0.b32.cont [13/16] 0.0, 128
  %1211 = vxpose.xlu0.b32.cont [14/16] 0.0, 128
  %1212 = vxpose.xlu0.b32.cont [15/16] 0.0, 128
  %1213 = vxpose.xlu0.b32.end [16/16] 0.0, 128
  %v1214 = vpop.trf.xlu0
  %v1215 = vpop.trf.xlu0
  %v1216 = vpop.trf.xlu0
  %v1217 = vpop.trf.xlu0
  %v1218 = vpop.trf.xlu0
  %v1219 = vpop.trf.xlu0
  %v1220 = vpop.trf.xlu0
  %v1221 = vpop.trf.xlu0
  %v1222 = vpop.trf.xlu0
  %v1223 = vpop.trf.xlu0
  %v1224 = vpop.trf.xlu0
  %v1225 = vpop.trf.xlu0
  %v1226 = vpop.trf.xlu0
  %v1227 = vpop.trf.xlu0
  %v1228 = vpop.trf.xlu0
  %v1229 = vpop.trf.xlu0
  %vm1230 = vcmask 162816
  %v1232 = vsel %vm1230, %v1214, 0
  %v1235 = vsel %vm1230, %v1215, 0
  %v1238 = vsel %vm1230, %v1216, 0
  %vm1240 = vcmask 1043456
  %v1242 = vsel %vm1240, 1.0, 0
  %1244 = vmatpush.msra.mxu0 0.0
  %1245 = vmatpush.msra.mxu0 0.0
  %1246 = vmatpush.msra.mxu0 0.0
  %1247 = vmatpush.msra.mxu0 0.0
  %1248 = vmatpush.msra.mxu0 0.0
  %1249 = vmatpush.msra.mxu0 0.0
  %1250 = vmatpush.msra.mxu0 0.0
  %1251 = vmatpush.msra.mxu0 0.0
  %1252 = vmatpush.msra.mxu0 0.0
  %1253 = vmatpush.msra.mxu0 0.0
  %1254 = vmatpush.msra.mxu0 0.0
  %1255 = vmatpush.msra.mxu0 0.0
  %1256 = vmatpush.msra.mxu0 0.0
  %1257 = vmatpush.msra.mxu0 %v1242
  %1258 = vmatpush.msra.mxu0 1.0
  %1259 = vmatpush.msra.mxu0 1.0
  %1260 = vmatmul.f32.gmra.mxu0 %v1232
  %v1261 = vpop.f32.mrf.mxu0
  %v1262 = vadd.f32 0.0, %v1261
  %1263 = vmatmul.f32.gmra.mxu0 %v1235
  %v1264 = vpop.f32.mrf.mxu0
  %v1265 = vadd.f32 0.0, %v1264
  %1266 = vmatmul.f32.gmra.mxu0 %v1238
  %v1267 = vpop.f32.mrf.mxu0
  %v1268 = vadd.f32 0.0, %v1267
  %1269 = vdwg.mxu0
  %v1270 = vsel %vm1240, %v942, 0
  %1272 = vmatpush.msra.mxu0 0.0
  %1273 = vmatpush.msra.mxu0 0.0
  %1274 = vmatpush.msra.mxu0 0.0
  %1275 = vmatpush.msra.mxu0 0.0
  %1276 = vmatpush.msra.mxu0 0.0
  %1277 = vmatpush.msra.mxu0 0.0
  %1278 = vmatpush.msra.mxu0 0.0
  %1279 = vmatpush.msra.mxu0 0.0
  %1280 = vmatpush.msra.mxu0 0.0
  %1281 = vmatpush.msra.mxu0 0.0
  %1282 = vmatpush.msra.mxu0 0.0
  %1283 = vmatpush.msra.mxu0 0.0
  %1284 = vmatpush.msra.mxu0 0.0
  %1285 = vmatpush.msra.mxu0 %v1270
  %1286 = vmatpush.msra.mxu0 %v941
  %1287 = vmatpush.msra.mxu0 %v940
  %1288 = vmatmul.f32.gmra.mxu0 %v1232
  %v1289 = vpop.f32.mrf.mxu0
  %v1290 = vadd.f32 0.0, %v1289
  %1291 = vmatmul.f32.gmra.mxu0 %v1235
  %v1292 = vpop.f32.mrf.mxu0
  %v1293 = vadd.f32 0.0, %v1292
  %1294 = vmatmul.f32.gmra.mxu0 %v1238
  %v1295 = vpop.f32.mrf.mxu0
  %v1296 = vadd.f32 0.0, %v1295
  %1297 = vdwg.mxu0
  %v1298 = vmax.f32 %v1262, 1.0
  %v1299 = vmax.f32 %v1265, 1.0
  %v1300 = vmax.f32 %v1268, 1.0
  %v1301 = vrcp.pop %v1298
  %v1302 = vrcp.pop %v1299
  %v1303 = vrcp.pop %v1300
  %1305 = vset.pattern.permute.xlu0 0
  %1306 = vperm.xlu0 %1305, %v1301
  %v1307 = vpop.permute.xlu0 %1306
  %1310 = vset.pattern.permute.xlu0 0
  %1311 = vperm.xlu0 %1310, %v1302
  %v1312 = vpop.permute.xlu0 %1311
  %1315 = vset.pattern.permute.xlu0 0
  %1316 = vperm.xlu0 %1315, %v1303
  %v1317 = vpop.permute.xlu0 %1316
  %v1319 = vmul.f32 %v1290, %v1307
  %v1320 = vmul.f32 %v1293, %v1312
  %v1321 = vmul.f32 %v1296, %v1317
  %v1323 = vsel %vm1230, %v1058, 0
  %v1326 = vsel %vm1230, %v1059, 0
  %v1329 = vsel %vm1230, %v1060, 0
  %v1332 = vsel %vm1240, %v1321, 0
  %1334 = vmatpush.msra.mxu0 0.0
  %1335 = vmatpush.msra.mxu0 0.0
  %1336 = vmatpush.msra.mxu0 0.0
  %1337 = vmatpush.msra.mxu0 0.0
  %1338 = vmatpush.msra.mxu0 0.0
  %1339 = vmatpush.msra.mxu0 0.0
  %1340 = vmatpush.msra.mxu0 0.0
  %1341 = vmatpush.msra.mxu0 0.0
  %1342 = vmatpush.msra.mxu0 0.0
  %1343 = vmatpush.msra.mxu0 0.0
  %1344 = vmatpush.msra.mxu0 0.0
  %1345 = vmatpush.msra.mxu0 0.0
  %1346 = vmatpush.msra.mxu0 0.0
  %1347 = vmatpush.msra.mxu0 %v1332
  %1348 = vmatpush.msra.mxu0 %v1320
  %1349 = vmatpush.msra.mxu0 %v1319
  %1350 = vmatmul.f32.gmra.mxu0 %v1323
  %v1351 = vpop.f32.mrf.mxu0
  %v1352 = vadd.f32 0.0, %v1351
  %1353 = vmatmul.f32.gmra.mxu0 %v1326
  %v1354 = vpop.f32.mrf.mxu0
  %v1355 = vadd.f32 0.0, %v1354
  %1356 = vmatmul.f32.gmra.mxu0 %v1329
  %v1357 = vpop.f32.mrf.mxu0
  %v1358 = vadd.f32 0.0, %v1357
  %1359 = vdwg.mxu0
  %v1360 = vsub.f32 %v940, %v1352
  %v1361 = vsub.f32 %v941, %v1355
  %v1362 = vsub.f32 %v942, %v1358
  %v1363 = vmul.f32 %v1360, %v1360
  %v1364 = vmul.f32 %v1361, %v1361
  %v1365 = vmul.f32 %v1362, %v1362
  %v1366 = vsel %vm953, %v1363, 0.0
  %1367 = vadd.xlane.f32.xlu0 %v1366
  %v1368 = vpop.xlane.xlu0 %1367
  %v1369 = vsel %vm953, %v1364, 0.0
  %1370 = vadd.xlane.f32.xlu0 %v1369
  %v1371 = vpop.xlane.xlu0 %1370
  %vm1372 = vcmask 519168
  %v1373 = vsel %vm1372, %v1365, 0.0
  %1374 = vadd.xlane.f32.xlu0 %v1373
  %v1375 = vpop.xlane.xlu0 %1374
  %v1377 = vsel %vm1230, %v1081, 0
  %1379 = vmatpush.msra.mxu0 0.0
  %1380 = vmatpush.msra.mxu0 0.0
  %1381 = vmatpush.msra.mxu0 0.0
  %1382 = vmatpush.msra.mxu0 0.0
  %1383 = vmatpush.msra.mxu0 0.0
  %1384 = vmatpush.msra.mxu0 0.0
  %1385 = vmatpush.msra.mxu0 0.0
  %1386 = vmatpush.msra.mxu0 0.0
  %1387 = vmatpush.msra.mxu0 0.0
  %1388 = vmatpush.msra.mxu0 0.0
  %1389 = vmatpush.msra.mxu0 0.0
  %1390 = vmatpush.msra.mxu0 0.0
  %1391 = vmatpush.msra.mxu0 0.0
  %1392 = vmatpush.msra.mxu0 %v1270
  %1393 = vmatpush.msra.mxu0 %v941
  %1394 = vmatpush.msra.mxu0 %v940
  %1395 = vmatmul.f32.gmra.mxu0 %v1377
  %v1396 = vpop.f32.mrf.mxu0
  %v1397 = vadd.f32 0.0, %v1396
  %1398 = vdwg.mxu0
  %v1399 = vmul.f32 %v1397, 0.2
  %vm1400 = vcmask 31744
  %v1402 = vsel %vm1400, %v1067, 0
  %v1405 = vsel %vm1400, %v1068, 0
  %v1408 = vsel %vm1400, %v1069, 0
  %v1411 = vsel %vm1240, %v1399, 0
  %1413 = vmatpush.msra.mxu0 0.0
  %1414 = vmatpush.msra.mxu0 0.0
  %1415 = vmatpush.msra.mxu0 0.0
  %1416 = vmatpush.msra.mxu0 0.0
  %1417 = vmatpush.msra.mxu0 0.0
  %1418 = vmatpush.msra.mxu0 0.0
  %1419 = vmatpush.msra.mxu0 0.0
  %1420 = vmatpush.msra.mxu0 0.0
  %1421 = vmatpush.msra.mxu0 0.0
  %1422 = vmatpush.msra.mxu0 0.0
  %1423 = vmatpush.msra.mxu0 0.0
  %1424 = vmatpush.msra.mxu0 0.0
  %1425 = vmatpush.msra.mxu0 0.0
  %1426 = vmatpush.msra.mxu0 0.0
  %1427 = vmatpush.msra.mxu0 0.0
  %1428 = vmatpush.msra.mxu0 %v1411
  %1429 = vmatmul.f32.gmra.mxu0 %v1402
  %v1430 = vpop.f32.mrf.mxu0
  %v1431 = vadd.f32 0.0, %v1430
  %1432 = vmatmul.f32.gmra.mxu0 %v1405
  %v1433 = vpop.f32.mrf.mxu0
  %v1434 = vadd.f32 0.0, %v1433
  %1435 = vmatmul.f32.gmra.mxu0 %v1408
  %v1436 = vpop.f32.mrf.mxu0
  %v1437 = vadd.f32 0.0, %v1436
  %1438 = vdwg.mxu0
  %v1439 = vsub.f32 %v1352, %v1431
  %v1440 = vsub.f32 %v1355, %v1434
  %v1441 = vsub.f32 %v1358, %v1437
  %v1442 = vmul.f32 %v1439, %v1439
  %v1443 = vmul.f32 %v1440, %v1440
  %v1444 = vmul.f32 %v1441, %v1441
  %v1445 = vsel %vm953, %v1442, 0.0
  %1446 = vadd.xlane.f32.xlu0 %v1445
  %v1447 = vpop.xlane.xlu0 %1446
  %v1448 = vsel %vm953, %v1443, 0.0
  %1449 = vadd.xlane.f32.xlu0 %v1448
  %v1450 = vpop.xlane.xlu0 %1449
  %v1451 = vsel %vm1372, %v1444, 0.0
  %1452 = vadd.xlane.f32.xlu0 %v1451
  %v1453 = vpop.xlane.xlu0 %1452
  %vm1454 = vcmp.eq.s32.totalorder %v1024, 0
  %v1455 = vsel %vm1454, %v1131, 0.0
  %v1456 = vsel %vm1454, %v1134, 0.0
  %v1457 = vsel %vm1454, %v1137, 0.0
  %vm1458 = vcmp.eq.s32.totalorder %v1024, 1
  %1460 = vset.pattern.permute.xlu0 0
  %1461 = vperm.xlu0 %1460, %v1195
  %v1462 = vpop.permute.xlu0 %1461
  %1465 = vset.pattern.permute.xlu0 0
  %1466 = vperm.xlu0 %1465, %v1196
  %v1467 = vpop.permute.xlu0 %1466
  %1470 = vset.pattern.permute.xlu0 0
  %1471 = vperm.xlu0 %1470, %v1197
  %v1472 = vpop.permute.xlu0 %1471
  %v1474 = vsel %vm1458, %v1462, 0.0
  %v1475 = vsel %vm1458, %v1467, 0.0
  %v1476 = vsel %vm1458, %v1472, 0.0
  %v1477 = vadd.f32 %v1455, %v1474
  %v1478 = vadd.f32 %v1456, %v1475
  %v1479 = vadd.f32 %v1457, %v1476
  %vm1480 = vcmp.eq.s32.totalorder %v1024, 2
  %v1481 = vsel %vm1480, %v1368, 0.0
  %v1482 = vsel %vm1480, %v1371, 0.0
  %v1483 = vsel %vm1480, %v1375, 0.0
  %v1484 = vadd.f32 %v1477, %v1481
  %v1485 = vadd.f32 %v1478, %v1482
  %v1486 = vadd.f32 %v1479, %v1483
  %vm1487 = vcmp.eq.s32.totalorder %v1024, 3
  %v1488 = vsel %vm1487, %v1447, 0.0
  %v1489 = vsel %vm1487, %v1450, 0.0
  %v1490 = vsel %vm1487, %v1453, 0.0
  %v1491 = vadd.f32 %v1484, %v1488
  %v1492 = vadd.f32 %v1485, %v1489
  %v1493 = vadd.f32 %v1486, %v1490
  %v1495 = vsel %vm1240, %v1493, 0
  %1497 = vmatpush.msra.mxu0 0.0
  %1498 = vmatpush.msra.mxu0 0.0
  %1499 = vmatpush.msra.mxu0 0.0
  %1500 = vmatpush.msra.mxu0 0.0
  %1501 = vmatpush.msra.mxu0 0.0
  %1502 = vmatpush.msra.mxu0 0.0
  %1503 = vmatpush.msra.mxu0 0.0
  %1504 = vmatpush.msra.mxu0 0.0
  %1505 = vmatpush.msra.mxu0 0.0
  %1506 = vmatpush.msra.mxu0 0.0
  %1507 = vmatpush.msra.mxu0 0.0
  %1508 = vmatpush.msra.mxu0 0.0
  %1509 = vmatpush.msra.mxu0 0.0
  %1510 = vmatpush.msra.mxu0 %v1495
  %1511 = vmatpush.msra.mxu0 %v1492
  %1512 = vmatpush.msra.mxu0 %v1491
  %1513 = vmatmul.f32.gmra.mxu0 %v1377
  %v1514 = vpop.f32.mrf.mxu0
  %v1515 = vadd.f32 0.0, %v1514
  %1516 = vdwg.mxu0
  %v1517 = vmul.f32 %v1515, 0.2
  %v1518 = vadd.f32 %v1515, 1e-06
  %v1519 = vrcp.pop %v1518
  %1521 = vrot.lane.b32.xlu0 %v1519, 127
  %v1522 = vpop.permute.xlu0 %1521
  %v1524 = vmul.f32 %v1515, %v1522
  %v1525 = vmul.f32 %v1524, 0.1
  %1527 = vrot.lane.b32.xlu0 %v1525, 126
  %v1528 = vpop.permute.xlu0 %1527
  %v1530 = vadd.f32 %v1517, %v1528
  %v1531 = vmul.f32 %v1530, %v1084
  %vm1532 = vcmask 3072
  %v1533 = vsel %vm1532, %v1531, 0.0
  %v1534 = vrot.slane %v1533, 4
  %v1535 = vadd.f32 %v1533, %v1534
  %v1536 = vrot.slane %v1535, 2
  %v1537 = vadd.f32 %v1535, %v1536
  %v1538 = vrot.slane %v1537, 1
  %v1539 = vadd.f32 %v1537, %v1538
  %v1540 = vmul.f32 %v1515, %v1084
  %vm1541 = vcmask 11272
  %v1542 = vsel %vm1541, %v1540, 0.0
  %v1543 = vrot.slane %v1542, 4
  %v1544 = vadd.f32 %v1542, %v1543
  %v1545 = vrot.slane %v1544, 2
  %v1546 = vadd.f32 %v1544, %v1545
  %v1547 = vrot.slane %v1546, 1
  %v1548 = vadd.f32 %v1546, %v1547
  %v1549 = vsub.f32 1.0, %v1084
  %v1550 = vmul.f32 %v1530, %v1549
  %v1551 = vsel %vm1532, %v1550, 0.0
  %v1552 = vrot.slane %v1551, 4
  %v1553 = vadd.f32 %v1551, %v1552
  %v1554 = vrot.slane %v1553, 2
  %v1555 = vadd.f32 %v1553, %v1554
  %v1556 = vrot.slane %v1555, 1
  %v1557 = vadd.f32 %v1555, %v1556
  %1559 = vset.pattern.permute.xlu0 0
  %1560 = vperm.xlu0 %1559, %v1539
  %v1561 = vpop.permute.xlu0 %1560
  %v1563 = vsel %vm1454, %v1561, 0.0
  %1565 = vset.pattern.permute.xlu0 1
  %1566 = vperm.xlu0 %1565, %v1548
  %v1567 = vpop.permute.xlu0 %1566
  %v1569 = vsel %vm1458, %v1567, 0.0
  %v1570 = vadd.f32 %v1563, %v1569
  %1572 = vset.pattern.permute.xlu0 0
  %1573 = vperm.xlu0 %1572, %v1557
  %v1574 = vpop.permute.xlu0 %1573
  %v1576 = vsel %vm1480, %v1574, 0.0
  %v1577 = vadd.f32 %v1570, %v1576
  %1578 = vst [vmem:[%s4] sm:$0x1] %v1577
  // Predicated region
  $region18: #{meta_forward.1} parent=0 // pred_check
    _
  $region19: #{meta_forward.1} parent=0 // pred_check_branch
    %1580 = sbr.rel (0) target = $region21
  $region20: #{meta_forward.1} parent=0 // pred_region
    _
  $region21: #{meta_forward.1} parent=0 // pred_fallthru
    _
  // Predicated region
  $region22: #{meta_forward.1} parent=0 // pred_check
    _
  $region23: #{meta_forward.1} parent=0 // pred_check_branch
    %1582 = sbr.rel (0) target = $region25
  $region24: #{meta_forward.1} parent=0 // pred_region
    _
  $region25: #{meta_forward.1} parent=0 // pred_fallthru
    _

</llo_original>
